<compile_context>
chip_gen: v7x
topology: tpu7x:2x2x1
jax: 0.10.0
libtpu: 0.0.40
codegen_flags: <defaults>
</compile_context>

<pallas_src>
import functools

import jax
import jax.numpy as jnp
from jax import lax
from jax.experimental import pallas as pl
from jax.experimental.pallas import tpu as pltpu

THRESH = 0.3
DECAY = 0.2
CFG_FC = (512, 50)
D_IN = 36 * 36 * 1  # 1296


def _round_up(x, m):
    return ((x + m - 1) // m) * m


def snn_lif_kernel(x_ref, w1_ref, b1_ref, wh_ref, bh_ref, out_ref, *, win):
    """One batch tile in VMEM: fc1 matmul + LIF time loop + fused head matmul."""
    x = x_ref[...]                                                    # (TB, K_PAD)
    # fc1 — input is identical every timestep, so compute the matmul once.
    x1 = jnp.dot(x, w1_ref[...], preferred_element_type=jnp.float32) + b1_ref[...]
    TB, H1 = x1.shape

    mem0 = jnp.zeros((TB, H1), jnp.float32)
    spike0 = jnp.zeros((TB, H1), jnp.float32)
    sum0 = jnp.zeros((TB, H1), jnp.float32)

    def body(step, carry):
        mem, spike, ssum = carry
        # spike is exactly 0/1, so this equals mem * decay * (1 - spike) + x1.
        mem = jnp.where(spike > 0.0, x1, mem * DECAY + x1)
        spike = (mem > THRESH).astype(jnp.float32)   # ActFun.forward: input.gt(thresh).float()
        ssum = ssum + spike
        return mem, spike, ssum

    # Full unroll only for short time windows; rolled loop keeps ld/st slots
    # bounded when the (TB, 512) carries live in VMEM.
    _, _, h1_sumspike = lax.fori_loop(
        0, win, body, (mem0, spike0, sum0), unroll=(win <= 16))

    rates = h1_sumspike * (1.0 / win)
    # Fused fc + task heads: (TB, 512) @ (512, OUT_PAD) + b, lane-dense output.
    out_ref[...] = (jnp.dot(rates, wh_ref[...],
                            preferred_element_type=jnp.float32) + bh_ref[...])


def snn_model_lif_forward(x_img, params, *, win, n_tasks, block_b=256):
    """Wrapper: flatten/pad, tile the batch with a grid, slice/reshape outputs."""
    w1, b1, w2, b2, wt, bt = params
    B = x_img.shape[0]
    x = x_img.reshape(B, -1).astype(jnp.float32)           # (B, 1296)

    H1 = CFG_FC[0]
    K_PAD = _round_up(D_IN, 256)                           # 1296 -> 1536 (MXU-aligned)
    OUT_DIM = n_tasks * 10
    OUT_PAD = _round_up(OUT_DIM, 128)                      # lane-dense output stores
    TB = min(block_b, _round_up(B, 8))                     # batch tile (multiple of 8)
    B_PAD = _round_up(B, TB)

    # Zero-pad activations / fc1 weight along the reduction dim (exact).
    x_pad = jnp.zeros((B_PAD, K_PAD), jnp.float32).at[:B, :D_IN].set(x)
    w1_pad = jnp.zeros((K_PAD, H1), jnp.float32).at[:D_IN, :].set(w1)

    # Fuse fc (512->50) and the n_tasks heads (50->10 each) into one matmul,
    # then zero-pad its output width to a multiple of 128.
    w_head = w2 @ wt                                       # (512, n_tasks*10)
    b_head = b2 @ wt + bt                                  # (1,   n_tasks*10)
    w_head_pad = jnp.zeros((H1, OUT_PAD), jnp.float32).at[:, :OUT_DIM].set(w_head)
    b_head_pad = jnp.zeros((1, OUT_PAD), jnp.float32).at[:, :OUT_DIM].set(b_head)

    grid = (pl.cdiv(B_PAD, TB),)
    out_pad = pl.pallas_call(
        functools.partial(snn_lif_kernel, win=win),
        out_shape=jax.ShapeDtypeStruct((B_PAD, OUT_PAD), jnp.float32),
        grid_spec=pltpu.PrefetchScalarGridSpec(
            num_scalar_prefetch=0,
            grid=grid,
            in_specs=[
                pl.BlockSpec((TB, K_PAD), lambda i: (i, 0)),       # x tile (pipelined)
                pl.BlockSpec((K_PAD, H1), lambda i: (0, 0)),       # w1 (resident)
                pl.BlockSpec((1, H1), lambda i: (0, 0)),           # b1 (resident)
                pl.BlockSpec((H1, OUT_PAD), lambda i: (0, 0)),     # fused head W (resident)
                pl.BlockSpec((1, OUT_PAD), lambda i: (0, 0)),      # fused head b (resident)
            ],
            out_specs=pl.BlockSpec((TB, OUT_PAD), lambda i: (i, 0)),
        ),
        compiler_params=pltpu.CompilerParams(
            dimension_semantics=("parallel",),                     # megacore on v7x
        ),
    )(x_pad, w1_pad, b1, w_head_pad, b_head_pad)

    # Drop batch/lane padding; reshape == torch.stack(output, dim=1).
    return out_pad[:B, :OUT_DIM].reshape(B, n_tasks, 10)


def init_params(key, n_tasks):
    """Deterministic nn.Linear-style init: U(-1/sqrt(fan_in), 1/sqrt(fan_in))."""
    def linear(k, fan_in, fan_out):
        kw, kb = jax.random.split(k)
        bound = 1.0 / jnp.sqrt(fan_in)
        w = jax.random.uniform(kw, (fan_in, fan_out), jnp.float32, -bound, bound)
        b = jax.random.uniform(kb, (1, fan_out), jnp.float32, -bound, bound)
        return w, b

    k1, k2, k3 = jax.random.split(key, 3)
    w1, b1 = linear(k1, D_IN, CFG_FC[0])                   # fc1: 1296 -> 512
    w2, b2 = linear(k2, CFG_FC[0], CFG_FC[1])              # fc : 512  -> 50
    task_keys = jax.random.split(k3, n_tasks)
    wts, bts = [], []
    for tk in task_keys:
        wt_i, bt_i = linear(tk, CFG_FC[1], 10)             # task_i: 50 -> 10
        wts.append(wt_i)
        bts.append(bt_i)
    wt = jnp.concatenate(wts, axis=1)                      # (50, n_tasks*10)
    bt = jnp.concatenate(bts, axis=1)                      # (1,  n_tasks*10)
    return w1, b1, w2, b2, wt, bt


def reference_forward(x_img, params, *, win, n_tasks):
    """Pure-JAX reference mirroring the PyTorch forward, for correctness check."""
    w1, b1, w2, b2, wt, bt = params
    B = x_img.shape[0]
    x = x_img.reshape(B, -1).astype(jnp.float32)
    mem = jnp.zeros((B, CFG_FC[0]), jnp.float32)
    spike = jnp.zeros((B, CFG_FC[0]), jnp.float32)
    ssum = jnp.zeros((B, CFG_FC[0]), jnp.float32)
    x1 = x @ w1 + b1
    for _ in range(win):
        mem = mem * DECAY * (1.0 - spike) + x1
        spike = (mem > THRESH).astype(jnp.float32)
        ssum = ssum + spike
    outs = (ssum / win) @ w2 + b2
    return (outs @ wt + bt).reshape(B, n_tasks, 10)


if __name__ == "__main__":
    key = jax.random.PRNGKey(0)
    k_params, k_input = jax.random.split(key)

    batch = 2
    n_tasks = 3
    win = 4

    params = init_params(k_params, n_tasks)
    x_img = jax.random.normal(k_input, (batch, 1, 36, 36), jnp.float32)  # NCHW input

    out = snn_model_lif_forward(x_img, params, win=win, n_tasks=n_tasks)
    out = jax.block_until_ready(out)

    ref = reference_forward(x_img, params, win=win, n_tasks=n_tasks)
    assert out.shape == (batch, n_tasks, 10), out.shape
    assert jnp.allclose(out, ref, atol=1e-4, rtol=1e-4), "mismatch vs reference"

    print("KERNEL_OK")
</pallas_src>

<mosaic_0001>
module attributes {stable_mosaic.version = 11 : i64} {
  func.func @snn_lif_kernel(%arg0: i32, %arg1: memref<8x1536xf32, #tpu.memory_space<vmem>>, %arg2: memref<1536x512xf32, #tpu.memory_space<vmem>>, %arg3: memref<1x512xf32, #tpu.memory_space<vmem>>, %arg4: memref<512x128xf32, #tpu.memory_space<vmem>>, %arg5: memref<1x128xf32, #tpu.memory_space<vmem>>, %arg6: memref<8x128xf32, #tpu.memory_space<vmem>>) attributes {dimension_semantics = [#tpu.dimension_semantics<parallel>], iteration_bounds = array<i64: 1>, scalar_prefetch = 0 : i64, scratch_operands = 0 : i64, tpu.core_type = #tpu.core_type<tc>, window_params = [{transform_indices = @transform_0, window_bounds = array<i64: 8, 1536>}, {pipeline_mode = #tpu.pipeline_mode<synchronous>, transform_indices = @transform_1, window_bounds = array<i64: 1536, 512>}, {pipeline_mode = #tpu.pipeline_mode<synchronous>, transform_indices = @transform_2, window_bounds = array<i64: 1, 512>}, {pipeline_mode = #tpu.pipeline_mode<synchronous>, transform_indices = @transform_3, window_bounds = array<i64: 512, 128>}, {pipeline_mode = #tpu.pipeline_mode<synchronous>, transform_indices = @transform_4, window_bounds = array<i64: 1, 128>}, {transform_indices = @transform_5, window_bounds = array<i64: 8, 128>}]} {
    %c0 = arith.constant 0 : index
    %c0_0 = arith.constant 0 : index
    %0 = vector.load %arg1[%c0, %c0_0] : memref<8x1536xf32, #tpu.memory_space<vmem>>, vector<8x1536xf32>
    %c0_1 = arith.constant 0 : index
    %c0_2 = arith.constant 0 : index
    %1 = vector.load %arg2[%c0_1, %c0_2] : memref<1536x512xf32, #tpu.memory_space<vmem>>, vector<1536x512xf32>
    %cst = arith.constant dense<0.000000e+00> : vector<8x512xf32>
    %2 = tpu.matmul %0, %1, %cst {dimension_numbers = #tpu.dot_dimension_numbers<[1], [0], [0], [1], [0, 0, 1, 1], [], []>} : vector<8x1536xf32>, vector<1536x512xf32>, vector<8x512xf32> -> vector<8x512xf32>
    %c0_3 = arith.constant 0 : index
    %c0_4 = arith.constant 0 : index
    %3 = vector.load %arg3[%c0_3, %c0_4] : memref<1x512xf32, #tpu.memory_space<vmem>>, vector<1x512xf32>
    %4 = vector.broadcast %3 : vector<1x512xf32> to vector<8x512xf32>
    %5 = arith.addf %2, %4 : vector<8x512xf32>
    %cst_5 = arith.constant 0.000000e+00 : f32
    %6 = vector.broadcast %cst_5 : f32 to vector<8x512xf32>
    %cst_6 = arith.constant 0.000000e+00 : f32
    %7 = vector.broadcast %cst_6 : f32 to vector<8x512xf32>
    %cst_7 = arith.constant 0.000000e+00 : f32
    %8 = vector.broadcast %cst_7 : f32 to vector<8x512xf32>
    %c0_i32 = arith.constant 0 : i32
    %cst_8 = arith.constant 0.000000e+00 : f32
    %9 = vector.broadcast %cst_8 : f32 to vector<8x512xf32>
    %10 = arith.cmpf ogt, %7, %9 : vector<8x512xf32>
    %cst_9 = arith.constant 2.000000e-01 : f32
    %11 = vector.broadcast %cst_9 : f32 to vector<8x512xf32>
    %12 = arith.mulf %6, %11 : vector<8x512xf32>
    %13 = arith.addf %12, %5 : vector<8x512xf32>
    %14 = arith.select %10, %5, %13 : vector<8x512xi1>, vector<8x512xf32>
    %cst_10 = arith.constant 3.000000e-01 : f32
    %15 = vector.broadcast %cst_10 : f32 to vector<8x512xf32>
    %16 = arith.cmpf ogt, %14, %15 : vector<8x512xf32>
    %17 = arith.extui %16 : vector<8x512xi1> to vector<8x512xi32>
    %18 = arith.sitofp %17 : vector<8x512xi32> to vector<8x512xf32>
    %19 = arith.addf %8, %18 : vector<8x512xf32>
    %c1_i32 = arith.constant 1 : i32
    %cst_11 = arith.constant 0.000000e+00 : f32
    %20 = vector.broadcast %cst_11 : f32 to vector<8x512xf32>
    %21 = arith.cmpf ogt, %18, %20 : vector<8x512xf32>
    %cst_12 = arith.constant 2.000000e-01 : f32
    %22 = vector.broadcast %cst_12 : f32 to vector<8x512xf32>
    %23 = arith.mulf %14, %22 : vector<8x512xf32>
    %24 = arith.addf %23, %5 : vector<8x512xf32>
    %25 = arith.select %21, %5, %24 : vector<8x512xi1>, vector<8x512xf32>
    %cst_13 = arith.constant 3.000000e-01 : f32
    %26 = vector.broadcast %cst_13 : f32 to vector<8x512xf32>
    %27 = arith.cmpf ogt, %25, %26 : vector<8x512xf32>
    %28 = arith.extui %27 : vector<8x512xi1> to vector<8x512xi32>
    %29 = arith.sitofp %28 : vector<8x512xi32> to vector<8x512xf32>
    %30 = arith.addf %19, %29 : vector<8x512xf32>
    %c2_i32 = arith.constant 2 : i32
    %cst_14 = arith.constant 0.000000e+00 : f32
    %31 = vector.broadcast %cst_14 : f32 to vector<8x512xf32>
    %32 = arith.cmpf ogt, %29, %31 : vector<8x512xf32>
    %cst_15 = arith.constant 2.000000e-01 : f32
    %33 = vector.broadcast %cst_15 : f32 to vector<8x512xf32>
    %34 = arith.mulf %25, %33 : vector<8x512xf32>
    %35 = arith.addf %34, %5 : vector<8x512xf32>
    %36 = arith.select %32, %5, %35 : vector<8x512xi1>, vector<8x512xf32>
    %cst_16 = arith.constant 3.000000e-01 : f32
    %37 = vector.broadcast %cst_16 : f32 to vector<8x512xf32>
    %38 = arith.cmpf ogt, %36, %37 : vector<8x512xf32>
    %39 = arith.extui %38 : vector<8x512xi1> to vector<8x512xi32>
    %40 = arith.sitofp %39 : vector<8x512xi32> to vector<8x512xf32>
    %41 = arith.addf %30, %40 : vector<8x512xf32>
    %c3_i32 = arith.constant 3 : i32
    %cst_17 = arith.constant 0.000000e+00 : f32
    %42 = vector.broadcast %cst_17 : f32 to vector<8x512xf32>
    %43 = arith.cmpf ogt, %40, %42 : vector<8x512xf32>
    %cst_18 = arith.constant 2.000000e-01 : f32
    %44 = vector.broadcast %cst_18 : f32 to vector<8x512xf32>
    %45 = arith.mulf %36, %44 : vector<8x512xf32>
    %46 = arith.addf %45, %5 : vector<8x512xf32>
    %47 = arith.select %43, %5, %46 : vector<8x512xi1>, vector<8x512xf32>
    %cst_19 = arith.constant 3.000000e-01 : f32
    %48 = vector.broadcast %cst_19 : f32 to vector<8x512xf32>
    %49 = arith.cmpf ogt, %47, %48 : vector<8x512xf32>
    %50 = arith.extui %49 : vector<8x512xi1> to vector<8x512xi32>
    %51 = arith.sitofp %50 : vector<8x512xi32> to vector<8x512xf32>
    %52 = arith.addf %41, %51 : vector<8x512xf32>
    %cst_20 = arith.constant 2.500000e-01 : f32
    %53 = vector.broadcast %cst_20 : f32 to vector<8x512xf32>
    %54 = arith.mulf %52, %53 : vector<8x512xf32>
    %c0_21 = arith.constant 0 : index
    %c0_22 = arith.constant 0 : index
    %55 = vector.load %arg4[%c0_21, %c0_22] : memref<512x128xf32, #tpu.memory_space<vmem>>, vector<512x128xf32>
    %cst_23 = arith.constant dense<0.000000e+00> : vector<8x128xf32>
    %56 = tpu.matmul %54, %55, %cst_23 {dimension_numbers = #tpu.dot_dimension_numbers<[1], [0], [0], [1], [0, 0, 1, 1], [], []>} : vector<8x512xf32>, vector<512x128xf32>, vector<8x128xf32> -> vector<8x128xf32>
    %c0_24 = arith.constant 0 : index
    %c0_25 = arith.constant 0 : index
    %57 = vector.load %arg5[%c0_24, %c0_25] : memref<1x128xf32, #tpu.memory_space<vmem>>, vector<1x128xf32>
    %58 = vector.broadcast %57 : vector<1x128xf32> to vector<8x128xf32>
    %59 = arith.addf %56, %58 : vector<8x128xf32>
    %c0_26 = arith.constant 0 : index
    %c0_27 = arith.constant 0 : index
    %60 = vector.load %arg6[%c0_26, %c0_27] : memref<8x128xf32, #tpu.memory_space<vmem>>, vector<8x128xf32>
    tpu.vector_store %arg6[%c0_26, %c0_27], %59 {strides = array<i32>} : memref<8x128xf32, #tpu.memory_space<vmem>>, vector<8x128xf32>,
    return
  }
  func.func @transform_0(%arg0: i32) -> (i32, i32) {
    %c0_i32 = arith.constant 0 : i32
    %c0_i32_0 = arith.constant 0 : i32
    return %arg0, %c0_i32 : i32, i32
  }
  func.func @transform_1(%arg0: i32) -> (i32, i32) {
    %c0_i32 = arith.constant 0 : i32
    %c0_i32_0 = arith.constant 0 : i32
    %c0_i32_1 = arith.constant 0 : i32
    return %c0_i32, %c0_i32_0 : i32, i32
  }
  func.func @transform_2(%arg0: i32) -> (i32, i32) {
    %c0_i32 = arith.constant 0 : i32
    %c0_i32_0 = arith.constant 0 : i32
    %c0_i32_1 = arith.constant 0 : i32
    return %c0_i32, %c0_i32_0 : i32, i32
  }
  func.func @transform_3(%arg0: i32) -> (i32, i32) {
    %c0_i32 = arith.constant 0 : i32
    %c0_i32_0 = arith.constant 0 : i32
    %c0_i32_1 = arith.constant 0 : i32
    return %c0_i32, %c0_i32_0 : i32, i32
  }
  func.func @transform_4(%arg0: i32) -> (i32, i32) {
    %c0_i32 = arith.constant 0 : i32
    %c0_i32_0 = arith.constant 0 : i32
    %c0_i32_1 = arith.constant 0 : i32
    return %c0_i32, %c0_i32_0 : i32, i32
  }
  func.func @transform_5(%arg0: i32) -> (i32, i32) {
    %c0_i32 = arith.constant 0 : i32
    %c0_i32_0 = arith.constant 0 : i32
    return %arg0, %c0_i32 : i32, i32
  }
}

</mosaic_0001>

<llo_original>
// kernel: tpu_custom_call.1
$region0: #{tpu_custom_call.1}
  #allocation0 [shape = 'u32[]', space=smem, size = 0x4, offset = 0x4, fixed_abs, tag = 'smem constant byte address 0x4 - core index']
  #allocation1 [shape = 'u32[144,128]{1,0:T(1,128)}', space=vmem, size = 0x12000, scoped, tag = 'internal scratch']
  %s0 = inlined_call_operand.hbm [shape: f32[8,1536], index: 0, kind: input, shape index: {}]
  %s1 = inlined_call_operand.hbm [shape: f32[1536,512], index: 1, kind: input, shape index: {}]
  %s2 = inlined_call_operand.hbm [shape: f32[1,512], index: 2, kind: input, shape index: {}]
  %s3 = inlined_call_operand.hbm [shape: f32[512,128], index: 3, kind: input, shape index: {}]
  %s4 = inlined_call_operand.hbm [shape: f32[1,128], index: 4, kind: input, shape index: {}]
  %s5 = inlined_call_operand.hbm [shape: f32[8,128], index: 5, kind: output, shape index: {}]
  %s6 = sld [smem:[#allocation0]]
  $region50: #{tpu_custom_call.1} parent=0
    _
  %s8 = ssub.s32 1, %s6
  %s9 = scalar_select 0, %s8, %s6
  $region1: #{tpu_custom_call.1} parent=0
    #allocation2 [shape = 'u8[49152]{0}', space=vmem, size = 0xc000, scoped, tag = 'input window, operand 0, single buffered']
    #allocation3 [shape = 's32[1]{0}', space=sflag, size = 0x4, scoped, tag = 'scoped memory for tpu_custom_call.1']
    #allocation4 [shape = 's32[1]{0}', space=sflag, size = 0x4, scoped, tag = 'scoped memory for tpu_custom_call.1']
    #allocation5 [shape = 'u8[3145728]{0}', space=vmem, size = 0x300000, scoped, tag = 'input window, operand 1, single buffered']
    #allocation6 [shape = 's32[1]{0}', space=sflag, size = 0x4, scoped, tag = 'scoped memory for tpu_custom_call.1']
    #allocation7 [shape = 'u8[2048]{0}', space=vmem, size = 0x800, scoped, tag = 'input window, operand 2, single buffered']
    #allocation8 [shape = 'u8[262144]{0}', space=vmem, size = 0x40000, scoped, tag = 'input window, operand 3, single buffered']
    #allocation9 [shape = 's32[1]{0}', space=sflag, size = 0x4, scoped, tag = 'scoped memory for tpu_custom_call.1']
    #allocation10 [shape = 'u8[512]{0}', space=vmem, size = 0x400, scoped, tag = 'input window, operand 4, single buffered']
    #allocation11 [shape = 'u8[4096]{0}', space=vmem, size = 0x1000, scoped, tag = 'output window, operand 0, single buffered']
    %10 = vsyncpa [#allocation3], 0
    %11 = vsyncpa [#allocation6], 0
    %12 = vsyncpa [#allocation9], 0
    %13 = vsyncpa [#allocation4], 0
    // Predicated region
    $region2: #{tpu_custom_call.1} parent=1 // pred_check
      _
    $region3: #{tpu_custom_call.1} parent=1 // pred_check_branch
      %15 = sbr.rel (0) target = $region5
    $region4: #{tpu_custom_call.1} parent=1 // pred_region
      %s17 = ssub.s32 1536, 1536
      %18 = vsyncadd [#allocation3], %s17
      %s20 = sshll.u32 [#allocation2], 4
      %s21 = int_to_ptr.vmem [resolvable:$true] %s20
      %23 = dma.hbm_to_vmem [thread:$0]  %s0, 1536, %s21, [#allocation3]
    $region5: #{tpu_custom_call.1} parent=1 // pred_fallthru
      _
    // Predicated region
    $region6: #{tpu_custom_call.1} parent=1 // pred_check
      _
    $region7: #{tpu_custom_call.1} parent=1 // pred_check_branch
      %25 = sbr.rel (0) target = $region9
    $region8: #{tpu_custom_call.1} parent=1 // pred_region
      %s27 = ssub.s32 98304, 98304
      %28 = vsyncadd [#allocation6], %s27
      %s29 = sshll.u32 [#allocation5], 4
      %s30 = int_to_ptr.vmem [resolvable:$true] %s29
      %35 = dma.hbm_to_vmem [thread:$0]  %s1, 98304, %s30, [#allocation6], 512, 512, 32
    $region9: #{tpu_custom_call.1} parent=1 // pred_fallthru
      _
    // Predicated region
    $region10: #{tpu_custom_call.1} parent=1 // pred_check
      _
    $region11: #{tpu_custom_call.1} parent=1 // pred_check_branch
      %37 = sbr.rel (0) target = $region13
    $region12: #{tpu_custom_call.1} parent=1 // pred_region
      %s39 = ssub.s32 64, 64
      %40 = vsyncadd [#allocation6], %s39
      %s42 = sshll.u32 [#allocation7], 4
      %s43 = int_to_ptr.vmem [resolvable:$true] %s42
      %45 = dma.hbm_to_vmem [thread:$0]  %s2, 64, %s43, [#allocation6]
    $region13: #{tpu_custom_call.1} parent=1 // pred_fallthru
      _
    // Predicated region
    $region14: #{tpu_custom_call.1} parent=1 // pred_check
      _
    $region15: #{tpu_custom_call.1} parent=1 // pred_check_branch
      %47 = sbr.rel (0) target = $region17
    $region16: #{tpu_custom_call.1} parent=1 // pred_region
      %s49 = ssub.s32 8192, 8192
      %50 = vsyncadd [#allocation9], %s49
      %s51 = sshll.u32 [#allocation8], 4
      %s52 = int_to_ptr.vmem [resolvable:$true] %s51
      %57 = dma.hbm_to_vmem [thread:$0]  %s3, 8192, %s52, [#allocation9], 128, 128, 8
    $region17: #{tpu_custom_call.1} parent=1 // pred_fallthru
      _
    // Predicated region
    $region18: #{tpu_custom_call.1} parent=1 // pred_check
      _
    $region19: #{tpu_custom_call.1} parent=1 // pred_check_branch
      %59 = sbr.rel (0) target = $region21
    $region20: #{tpu_custom_call.1} parent=1 // pred_region
      %s61 = ssub.s32 16, 16
      %62 = vsyncadd [#allocation9], %s61
      %s64 = sshll.u32 [#allocation10], 4
      %s65 = int_to_ptr.vmem [resolvable:$true] %s64
      %67 = dma.hbm_to_vmem [thread:$0]  %s4, 16, %s65, [#allocation9]
    $region21: #{tpu_custom_call.1} parent=1 // pred_fallthru
      _
    // Predicated region
    $region22: #{tpu_custom_call.1} parent=1 // pred_check
      _
    $region23: #{tpu_custom_call.1} parent=1 // pred_check_branch
      %69 = sbr.rel (0) target = $region25
    $region24: #{tpu_custom_call.1} parent=1 // pred_region
      %70 = dma.done [#allocation3], 1536
    $region25: #{tpu_custom_call.1} parent=1 // pred_fallthru
      _
    // Predicated region
    $region26: #{tpu_custom_call.1} parent=1 // pred_check
      _
    $region27: #{tpu_custom_call.1} parent=1 // pred_check_branch
      %72 = sbr.rel (0) target = $region29
    $region28: #{tpu_custom_call.1} parent=1 // pred_region
      %73 = dma.done [#allocation6], 98304
    $region29: #{tpu_custom_call.1} parent=1 // pred_fallthru
      _
    // Predicated region
    $region30: #{tpu_custom_call.1} parent=1 // pred_check
      _
    $region31: #{tpu_custom_call.1} parent=1 // pred_check_branch
      %75 = sbr.rel (0) target = $region33
    $region32: #{tpu_custom_call.1} parent=1 // pred_region
      %76 = dma.done [#allocation6], 64
    $region33: #{tpu_custom_call.1} parent=1 // pred_fallthru
      _
    // Predicated region
    $region34: #{tpu_custom_call.1} parent=1 // pred_check
      _
    $region35: #{tpu_custom_call.1} parent=1 // pred_check_branch
      %78 = sbr.rel (0) target = $region37
    $region36: #{tpu_custom_call.1} parent=1 // pred_region
      %79 = dma.done [#allocation9], 8192
    $region37: #{tpu_custom_call.1} parent=1 // pred_fallthru
      _
    // Predicated region
    $region38: #{tpu_custom_call.1} parent=1 // pred_check
      _
    $region39: #{tpu_custom_call.1} parent=1 // pred_check_branch
      %81 = sbr.rel (0) target = $region41
    $region40: #{tpu_custom_call.1} parent=1 // pred_region
      %82 = dma.done [#allocation9], 16
    $region41: #{tpu_custom_call.1} parent=1 // pred_fallthru
      _
    %v83 = vld [vmem:[#allocation2] sm:$0xff]
    %v84 = vld [vmem:[#allocation2 + $0x8] sm:$0xff]
    %v85 = vld [vmem:[#allocation2 + $0x10] sm:$0xff]
    %v86 = vld [vmem:[#allocation2 + $0x18] sm:$0xff]
    %v87 = vld [vmem:[#allocation2 + $0x20] sm:$0xff]
    %v88 = vld [vmem:[#allocation2 + $0x28] sm:$0xff]
    %v89 = vld [vmem:[#allocation2 + $0x30] sm:$0xff]
    %v90 = vld [vmem:[#allocation2 + $0x38] sm:$0xff]
    %v91 = vld [vmem:[#allocation2 + $0x40] sm:$0xff]
    %v92 = vld [vmem:[#allocation2 + $0x48] sm:$0xff]
    %v93 = vld [vmem:[#allocation2 + $0x50] sm:$0xff]
    %v94 = vld [vmem:[#allocation2 + $0x58] sm:$0xff]
    %v95 = vld [vmem:[#allocation5] sm:$0xff]
    %v96 = vld [vmem:[#allocation5 + $0x8] sm:$0xff]
    %v97 = vld [vmem:[#allocation5 + $0x10] sm:$0xff]
    %v98 = vld [vmem:[#allocation5 + $0x18] sm:$0xff]
    %v99 = vld [vmem:[#allocation5 + $0x20] sm:$0xff]
    %v100 = vld [vmem:[#allocation5 + $0x28] sm:$0xff]
    %v101 = vld [vmem:[#allocation5 + $0x30] sm:$0xff]
    %v102 = vld [vmem:[#allocation5 + $0x38] sm:$0xff]
    %v103 = vld [vmem:[#allocation5 + $0x40] sm:$0xff]
    %v104 = vld [vmem:[#allocation5 + $0x48] sm:$0xff]
    %v105 = vld [vmem:[#allocation5 + $0x50] sm:$0xff]
    %v106 = vld [vmem:[#allocation5 + $0x58] sm:$0xff]
    %v107 = vld [vmem:[#allocation5 + $0x60] sm:$0xff]
    %v108 = vld [vmem:[#allocation5 + $0x68] sm:$0xff]
    %v109 = vld [vmem:[#allocation5 + $0x70] sm:$0xff]
    %v110 = vld [vmem:[#allocation5 + $0x78] sm:$0xff]
    %v111 = vld [vmem:[#allocation5 + $0x80] sm:$0xff]
    %v112 = vld [vmem:[#allocation5 + $0x88] sm:$0xff]
    %v113 = vld [vmem:[#allocation5 + $0x90] sm:$0xff]
    %v114 = vld [vmem:[#allocation5 + $0x98] sm:$0xff]
    %v115 = vld [vmem:[#allocation5 + $0xa0] sm:$0xff]
    %v116 = vld [vmem:[#allocation5 + $0xa8] sm:$0xff]
    %v117 = vld [vmem:[#allocation5 + $0xb0] sm:$0xff]
    %v118 = vld [vmem:[#allocation5 + $0xb8] sm:$0xff]
    %v119 = vld [vmem:[#allocation5 + $0xc0] sm:$0xff]
    %v120 = vld [vmem:[#allocation5 + $0xc8] sm:$0xff]
    %v121 = vld [vmem:[#allocation5 + $0xd0] sm:$0xff]
    %v122 = vld [vmem:[#allocation5 + $0xd8] sm:$0xff]
    %v123 = vld [vmem:[#allocation5 + $0xe0] sm:$0xff]
    %v124 = vld [vmem:[#allocation5 + $0xe8] sm:$0xff]
    %v125 = vld [vmem:[#allocation5 + $0xf0] sm:$0xff]
    %v126 = vld [vmem:[#allocation5 + $0xf8] sm:$0xff]
    %v127 = vld [vmem:[#allocation5 + $0x100] sm:$0xff]
    %v128 = vld [vmem:[#allocation5 + $0x108] sm:$0xff]
    %v129 = vld [vmem:[#allocation5 + $0x110] sm:$0xff]
    %v130 = vld [vmem:[#allocation5 + $0x118] sm:$0xff]
    %v131 = vld [vmem:[#allocation5 + $0x120] sm:$0xff]
    %v132 = vld [vmem:[#allocation5 + $0x128] sm:$0xff]
    %v133 = vld [vmem:[#allocation5 + $0x130] sm:$0xff]
    %v134 = vld [vmem:[#allocation5 + $0x138] sm:$0xff]
    %v135 = vld [vmem:[#allocation5 + $0x140] sm:$0xff]
    %v136 = vld [vmem:[#allocation5 + $0x148] sm:$0xff]
    %v137 = vld [vmem:[#allocation5 + $0x150] sm:$0xff]
    %v138 = vld [vmem:[#allocation5 + $0x158] sm:$0xff]
    %v139 = vld [vmem:[#allocation5 + $0x160] sm:$0xff]
    %v140 = vld [vmem:[#allocation5 + $0x168] sm:$0xff]
    %v141 = vld [vmem:[#allocation5 + $0x170] sm:$0xff]
    %v142 = vld [vmem:[#allocation5 + $0x178] sm:$0xff]
    %v143 = vld [vmem:[#allocation5 + $0x180] sm:$0xff]
    %v144 = vld [vmem:[#allocation5 + $0x188] sm:$0xff]
    %v145 = vld [vmem:[#allocation5 + $0x190] sm:$0xff]
    %v146 = vld [vmem:[#allocation5 + $0x198] sm:$0xff]
    %v147 = vld [vmem:[#allocation5 + $0x1a0] sm:$0xff]
    %v148 = vld [vmem:[#allocation5 + $0x1a8] sm:$0xff]
    %v149 = vld [vmem:[#allocation5 + $0x1b0] sm:$0xff]
    %v150 = vld [vmem:[#allocation5 + $0x1b8] sm:$0xff]
    %v151 = vld [vmem:[#allocation5 + $0x1c0] sm:$0xff]
    %v152 = vld [vmem:[#allocation5 + $0x1c8] sm:$0xff]
    %v153 = vld [vmem:[#allocation5 + $0x1d0] sm:$0xff]
    %v154 = vld [vmem:[#allocation5 + $0x1d8] sm:$0xff]
    %v155 = vld [vmem:[#allocation5 + $0x1e0] sm:$0xff]
    %v156 = vld [vmem:[#allocation5 + $0x1e8] sm:$0xff]
    %v157 = vld [vmem:[#allocation5 + $0x1f0] sm:$0xff]
    %v158 = vld [vmem:[#allocation5 + $0x1f8] sm:$0xff]
    %v159 = vld [vmem:[#allocation5 + $0x200] sm:$0xff]
    %v160 = vld [vmem:[#allocation5 + $0x208] sm:$0xff]
    %v161 = vld [vmem:[#allocation5 + $0x210] sm:$0xff]
    %v162 = vld [vmem:[#allocation5 + $0x218] sm:$0xff]
    %v163 = vld [vmem:[#allocation5 + $0x220] sm:$0xff]
    %v164 = vld [vmem:[#allocation5 + $0x228] sm:$0xff]
    %v165 = vld [vmem:[#allocation5 + $0x230] sm:$0xff]
    %v166 = vld [vmem:[#allocation5 + $0x238] sm:$0xff]
    %v167 = vld [vmem:[#allocation5 + $0x240] sm:$0xff]
    %v168 = vld [vmem:[#allocation5 + $0x248] sm:$0xff]
    %v169 = vld [vmem:[#allocation5 + $0x250] sm:$0xff]
    %v170 = vld [vmem:[#allocation5 + $0x258] sm:$0xff]
    %v171 = vld [vmem:[#allocation5 + $0x260] sm:$0xff]
    %v172 = vld [vmem:[#allocation5 + $0x268] sm:$0xff]
    %v173 = vld [vmem:[#allocation5 + $0x270] sm:$0xff]
    %v174 = vld [vmem:[#allocation5 + $0x278] sm:$0xff]
    %v175 = vld [vmem:[#allocation5 + $0x280] sm:$0xff]
    %v176 = vld [vmem:[#allocation5 + $0x288] sm:$0xff]
    %v177 = vld [vmem:[#allocation5 + $0x290] sm:$0xff]
    %v178 = vld [vmem:[#allocation5 + $0x298] sm:$0xff]
    %v179 = vld [vmem:[#allocation5 + $0x2a0] sm:$0xff]
    %v180 = vld [vmem:[#allocation5 + $0x2a8] sm:$0xff]
    %v181 = vld [vmem:[#allocation5 + $0x2b0] sm:$0xff]
    %v182 = vld [vmem:[#allocation5 + $0x2b8] sm:$0xff]
    %v183 = vld [vmem:[#allocation5 + $0x2c0] sm:$0xff]
    %v184 = vld [vmem:[#allocation5 + $0x2c8] sm:$0xff]
    %v185 = vld [vmem:[#allocation5 + $0x2d0] sm:$0xff]
    %v186 = vld [vmem:[#allocation5 + $0x2d8] sm:$0xff]
    %v187 = vld [vmem:[#allocation5 + $0x2e0] sm:$0xff]
    %v188 = vld [vmem:[#allocation5 + $0x2e8] sm:$0xff]
    %v189 = vld [vmem:[#allocation5 + $0x2f0] sm:$0xff]
    %v190 = vld [vmem:[#allocation5 + $0x2f8] sm:$0xff]
    %v191 = vld [vmem:[#allocation5 + $0x300] sm:$0xff]
    %v192 = vld [vmem:[#allocation5 + $0x308] sm:$0xff]
    %v193 = vld [vmem:[#allocation5 + $0x310] sm:$0xff]
    %v194 = vld [vmem:[#allocation5 + $0x318] sm:$0xff]
    %v195 = vld [vmem:[#allocation5 + $0x320] sm:$0xff]
    %v196 = vld [vmem:[#allocation5 + $0x328] sm:$0xff]
    %v197 = vld [vmem:[#allocation5 + $0x330] sm:$0xff]
    %v198 = vld [vmem:[#allocation5 + $0x338] sm:$0xff]
    %v199 = vld [vmem:[#allocation5 + $0x340] sm:$0xff]
    %v200 = vld [vmem:[#allocation5 + $0x348] sm:$0xff]
    %v201 = vld [vmem:[#allocation5 + $0x350] sm:$0xff]
    %v202 = vld [vmem:[#allocation5 + $0x358] sm:$0xff]
    %v203 = vld [vmem:[#allocation5 + $0x360] sm:$0xff]
    %v204 = vld [vmem:[#allocation5 + $0x368] sm:$0xff]
    %v205 = vld [vmem:[#allocation5 + $0x370] sm:$0xff]
    %v206 = vld [vmem:[#allocation5 + $0x378] sm:$0xff]
    %v207 = vld [vmem:[#allocation5 + $0x380] sm:$0xff]
    %v208 = vld [vmem:[#allocation5 + $0x388] sm:$0xff]
    %v209 = vld [vmem:[#allocation5 + $0x390] sm:$0xff]
    %v210 = vld [vmem:[#allocation5 + $0x398] sm:$0xff]
    %v211 = vld [vmem:[#allocation5 + $0x3a0] sm:$0xff]
    %v212 = vld [vmem:[#allocation5 + $0x3a8] sm:$0xff]
    %v213 = vld [vmem:[#allocation5 + $0x3b0] sm:$0xff]
    %v214 = vld [vmem:[#allocation5 + $0x3b8] sm:$0xff]
    %v215 = vld [vmem:[#allocation5 + $0x3c0] sm:$0xff]
    %v216 = vld [vmem:[#allocation5 + $0x3c8] sm:$0xff]
    %v217 = vld [vmem:[#allocation5 + $0x3d0] sm:$0xff]
    %v218 = vld [vmem:[#allocation5 + $0x3d8] sm:$0xff]
    %v219 = vld [vmem:[#allocation5 + $0x3e0] sm:$0xff]
    %v220 = vld [vmem:[#allocation5 + $0x3e8] sm:$0xff]
    %v221 = vld [vmem:[#allocation5 + $0x3f0] sm:$0xff]
    %v222 = vld [vmem:[#allocation5 + $0x3f8] sm:$0xff]
    %v223 = vld [vmem:[#allocation5 + $0x400] sm:$0xff]
    %v224 = vld [vmem:[#allocation5 + $0x408] sm:$0xff]
    %v225 = vld [vmem:[#allocation5 + $0x410] sm:$0xff]
    %v226 = vld [vmem:[#allocation5 + $0x418] sm:$0xff]
    %v227 = vld [vmem:[#allocation5 + $0x420] sm:$0xff]
    %v228 = vld [vmem:[#allocation5 + $0x428] sm:$0xff]
    %v229 = vld [vmem:[#allocation5 + $0x430] sm:$0xff]
    %v230 = vld [vmem:[#allocation5 + $0x438] sm:$0xff]
    %v231 = vld [vmem:[#allocation5 + $0x440] sm:$0xff]
    %v232 = vld [vmem:[#allocation5 + $0x448] sm:$0xff]
    %v233 = vld [vmem:[#allocation5 + $0x450] sm:$0xff]
    %v234 = vld [vmem:[#allocation5 + $0x458] sm:$0xff]
    %v235 = vld [vmem:[#allocation5 + $0x460] sm:$0xff]
    %v236 = vld [vmem:[#allocation5 + $0x468] sm:$0xff]
    %v237 = vld [vmem:[#allocation5 + $0x470] sm:$0xff]
    %v238 = vld [vmem:[#allocation5 + $0x478] sm:$0xff]
    %v239 = vld [vmem:[#allocation5 + $0x480] sm:$0xff]
    %v240 = vld [vmem:[#allocation5 + $0x488] sm:$0xff]
    %v241 = vld [vmem:[#allocation5 + $0x490] sm:$0xff]
    %v242 = vld [vmem:[#allocation5 + $0x498] sm:$0xff]
    %v243 = vld [vmem:[#allocation5 + $0x4a0] sm:$0xff]
    %v244 = vld [vmem:[#allocation5 + $0x4a8] sm:$0xff]
    %v245 = vld [vmem:[#allocation5 + $0x4b0] sm:$0xff]
    %v246 = vld [vmem:[#allocation5 + $0x4b8] sm:$0xff]
    %v247 = vld [vmem:[#allocation5 + $0x4c0] sm:$0xff]
    %v248 = vld [vmem:[#allocation5 + $0x4c8] sm:$0xff]
    %v249 = vld [vmem:[#allocation5 + $0x4d0] sm:$0xff]
    %v250 = vld [vmem:[#allocation5 + $0x4d8] sm:$0xff]
    %v251 = vld [vmem:[#allocation5 + $0x4e0] sm:$0xff]
    %v252 = vld [vmem:[#allocation5 + $0x4e8] sm:$0xff]
    %v253 = vld [vmem:[#allocation5 + $0x4f0] sm:$0xff]
    %v254 = vld [vmem:[#allocation5 + $0x4f8] sm:$0xff]
    %v255 = vld [vmem:[#allocation5 + $0x500] sm:$0xff]
    %v256 = vld [vmem:[#allocation5 + $0x508] sm:$0xff]
    %v257 = vld [vmem:[#allocation5 + $0x510] sm:$0xff]
    %v258 = vld [vmem:[#allocation5 + $0x518] sm:$0xff]
    %v259 = vld [vmem:[#allocation5 + $0x520] sm:$0xff]
    %v260 = vld [vmem:[#allocation5 + $0x528] sm:$0xff]
    %v261 = vld [vmem:[#allocation5 + $0x530] sm:$0xff]
    %v262 = vld [vmem:[#allocation5 + $0x538] sm:$0xff]
    %v263 = vld [vmem:[#allocation5 + $0x540] sm:$0xff]
    %v264 = vld [vmem:[#allocation5 + $0x548] sm:$0xff]
    %v265 = vld [vmem:[#allocation5 + $0x550] sm:$0xff]
    %v266 = vld [vmem:[#allocation5 + $0x558] sm:$0xff]
    %v267 = vld [vmem:[#allocation5 + $0x560] sm:$0xff]
    %v268 = vld [vmem:[#allocation5 + $0x568] sm:$0xff]
    %v269 = vld [vmem:[#allocation5 + $0x570] sm:$0xff]
    %v270 = vld [vmem:[#allocation5 + $0x578] sm:$0xff]
    %v271 = vld [vmem:[#allocation5 + $0x580] sm:$0xff]
    %v272 = vld [vmem:[#allocation5 + $0x588] sm:$0xff]
    %v273 = vld [vmem:[#allocation5 + $0x590] sm:$0xff]
    %v274 = vld [vmem:[#allocation5 + $0x598] sm:$0xff]
    %v275 = vld [vmem:[#allocation5 + $0x5a0] sm:$0xff]
    %v276 = vld [vmem:[#allocation5 + $0x5a8] sm:$0xff]
    %v277 = vld [vmem:[#allocation5 + $0x5b0] sm:$0xff]
    %v278 = vld [vmem:[#allocation5 + $0x5b8] sm:$0xff]
    %v279 = vld [vmem:[#allocation5 + $0x5c0] sm:$0xff]
    %v280 = vld [vmem:[#allocation5 + $0x5c8] sm:$0xff]
    %v281 = vld [vmem:[#allocation5 + $0x5d0] sm:$0xff]
    %v282 = vld [vmem:[#allocation5 + $0x5d8] sm:$0xff]
    %v283 = vld [vmem:[#allocation5 + $0x5e0] sm:$0xff]
    %v284 = vld [vmem:[#allocation5 + $0x5e8] sm:$0xff]
    %v285 = vld [vmem:[#allocation5 + $0x5f0] sm:$0xff]
    %v286 = vld [vmem:[#allocation5 + $0x5f8] sm:$0xff]
    %v287 = vld [vmem:[#allocation5 + $0x600] sm:$0xff]
    %v288 = vld [vmem:[#allocation5 + $0x608] sm:$0xff]
    %v289 = vld [vmem:[#allocation5 + $0x610] sm:$0xff]
    %v290 = vld [vmem:[#allocation5 + $0x618] sm:$0xff]
    %v291 = vld [vmem:[#allocation5 + $0x620] sm:$0xff]
    %v292 = vld [vmem:[#allocation5 + $0x628] sm:$0xff]
    %v293 = vld [vmem:[#allocation5 + $0x630] sm:$0xff]
    %v294 = vld [vmem:[#allocation5 + $0x638] sm:$0xff]
    %v295 = vld [vmem:[#allocation5 + $0x640] sm:$0xff]
    %v296 = vld [vmem:[#allocation5 + $0x648] sm:$0xff]
    %v297 = vld [vmem:[#allocation5 + $0x650] sm:$0xff]
    %v298 = vld [vmem:[#allocation5 + $0x658] sm:$0xff]
    %v299 = vld [vmem:[#allocation5 + $0x660] sm:$0xff]
    %v300 = vld [vmem:[#allocation5 + $0x668] sm:$0xff]
    %v301 = vld [vmem:[#allocation5 + $0x670] sm:$0xff]
    %v302 = vld [vmem:[#allocation5 + $0x678] sm:$0xff]
    %v303 = vld [vmem:[#allocation5 + $0x680] sm:$0xff]
    %v304 = vld [vmem:[#allocation5 + $0x688] sm:$0xff]
    %v305 = vld [vmem:[#allocation5 + $0x690] sm:$0xff]
    %v306 = vld [vmem:[#allocation5 + $0x698] sm:$0xff]
    %v307 = vld [vmem:[#allocation5 + $0x6a0] sm:$0xff]
    %v308 = vld [vmem:[#allocation5 + $0x6a8] sm:$0xff]
    %v309 = vld [vmem:[#allocation5 + $0x6b0] sm:$0xff]
    %v310 = vld [vmem:[#allocation5 + $0x6b8] sm:$0xff]
    %v311 = vld [vmem:[#allocation5 + $0x6c0] sm:$0xff]
    %v312 = vld [vmem:[#allocation5 + $0x6c8] sm:$0xff]
    %v313 = vld [vmem:[#allocation5 + $0x6d0] sm:$0xff]
    %v314 = vld [vmem:[#allocation5 + $0x6d8] sm:$0xff]
    %v315 = vld [vmem:[#allocation5 + $0x6e0] sm:$0xff]
    %v316 = vld [vmem:[#allocation5 + $0x6e8] sm:$0xff]
    %v317 = vld [vmem:[#allocation5 + $0x6f0] sm:$0xff]
    %v318 = vld [vmem:[#allocation5 + $0x6f8] sm:$0xff]
    %v319 = vld [vmem:[#allocation5 + $0x700] sm:$0xff]
    %v320 = vld [vmem:[#allocation5 + $0x708] sm:$0xff]
    %v321 = vld [vmem:[#allocation5 + $0x710] sm:$0xff]
    %v322 = vld [vmem:[#allocation5 + $0x718] sm:$0xff]
    %v323 = vld [vmem:[#allocation5 + $0x720] sm:$0xff]
    %v324 = vld [vmem:[#allocation5 + $0x728] sm:$0xff]
    %v325 = vld [vmem:[#allocation5 + $0x730] sm:$0xff]
    %v326 = vld [vmem:[#allocation5 + $0x738] sm:$0xff]
    %v327 = vld [vmem:[#allocation5 + $0x740] sm:$0xff]
    %v328 = vld [vmem:[#allocation5 + $0x748] sm:$0xff]
    %v329 = vld [vmem:[#allocation5 + $0x750] sm:$0xff]
    %v330 = vld [vmem:[#allocation5 + $0x758] sm:$0xff]
    %v331 = vld [vmem:[#allocation5 + $0x760] sm:$0xff]
    %v332 = vld [vmem:[#allocation5 + $0x768] sm:$0xff]
    %v333 = vld [vmem:[#allocation5 + $0x770] sm:$0xff]
    %v334 = vld [vmem:[#allocation5 + $0x778] sm:$0xff]
    %v335 = vld [vmem:[#allocation5 + $0x780] sm:$0xff]
    %v336 = vld [vmem:[#allocation5 + $0x788] sm:$0xff]
    %v337 = vld [vmem:[#allocation5 + $0x790] sm:$0xff]
    %v338 = vld [vmem:[#allocation5 + $0x798] sm:$0xff]
    %v339 = vld [vmem:[#allocation5 + $0x7a0] sm:$0xff]
    %v340 = vld [vmem:[#allocation5 + $0x7a8] sm:$0xff]
    %v341 = vld [vmem:[#allocation5 + $0x7b0] sm:$0xff]
    %v342 = vld [vmem:[#allocation5 + $0x7b8] sm:$0xff]
    %v343 = vld [vmem:[#allocation5 + $0x7c0] sm:$0xff]
    %v344 = vld [vmem:[#allocation5 + $0x7c8] sm:$0xff]
    %v345 = vld [vmem:[#allocation5 + $0x7d0] sm:$0xff]
    %v346 = vld [vmem:[#allocation5 + $0x7d8] sm:$0xff]
    %v347 = vld [vmem:[#allocation5 + $0x7e0] sm:$0xff]
    %v348 = vld [vmem:[#allocation5 + $0x7e8] sm:$0xff]
    %v349 = vld [vmem:[#allocation5 + $0x7f0] sm:$0xff]
    %v350 = vld [vmem:[#allocation5 + $0x7f8] sm:$0xff]
    %v351 = vld [vmem:[#allocation5 + $0x800] sm:$0xff]
    %v352 = vld [vmem:[#allocation5 + $0x808] sm:$0xff]
    %v353 = vld [vmem:[#allocation5 + $0x810] sm:$0xff]
    %v354 = vld [vmem:[#allocation5 + $0x818] sm:$0xff]
    %v355 = vld [vmem:[#allocation5 + $0x820] sm:$0xff]
    %v356 = vld [vmem:[#allocation5 + $0x828] sm:$0xff]
    %v357 = vld [vmem:[#allocation5 + $0x830] sm:$0xff]
    %v358 = vld [vmem:[#allocation5 + $0x838] sm:$0xff]
    %v359 = vld [vmem:[#allocation5 + $0x840] sm:$0xff]
    %v360 = vld [vmem:[#allocation5 + $0x848] sm:$0xff]
    %v361 = vld [vmem:[#allocation5 + $0x850] sm:$0xff]
    %v362 = vld [vmem:[#allocation5 + $0x858] sm:$0xff]
    %v363 = vld [vmem:[#allocation5 + $0x860] sm:$0xff]
    %v364 = vld [vmem:[#allocation5 + $0x868] sm:$0xff]
    %v365 = vld [vmem:[#allocation5 + $0x870] sm:$0xff]
    %v366 = vld [vmem:[#allocation5 + $0x878] sm:$0xff]
    %v367 = vld [vmem:[#allocation5 + $0x880] sm:$0xff]
    %v368 = vld [vmem:[#allocation5 + $0x888] sm:$0xff]
    %v369 = vld [vmem:[#allocation5 + $0x890] sm:$0xff]
    %v370 = vld [vmem:[#allocation5 + $0x898] sm:$0xff]
    %v371 = vld [vmem:[#allocation5 + $0x8a0] sm:$0xff]
    %v372 = vld [vmem:[#allocation5 + $0x8a8] sm:$0xff]
    %v373 = vld [vmem:[#allocation5 + $0x8b0] sm:$0xff]
    %v374 = vld [vmem:[#allocation5 + $0x8b8] sm:$0xff]
    %v375 = vld [vmem:[#allocation5 + $0x8c0] sm:$0xff]
    %v376 = vld [vmem:[#allocation5 + $0x8c8] sm:$0xff]
    %v377 = vld [vmem:[#allocation5 + $0x8d0] sm:$0xff]
    %v378 = vld [vmem:[#allocation5 + $0x8d8] sm:$0xff]
    %v379 = vld [vmem:[#allocation5 + $0x8e0] sm:$0xff]
    %v380 = vld [vmem:[#allocation5 + $0x8e8] sm:$0xff]
    %v381 = vld [vmem:[#allocation5 + $0x8f0] sm:$0xff]
    %v382 = vld [vmem:[#allocation5 + $0x8f8] sm:$0xff]
    %v383 = vld [vmem:[#allocation5 + $0x900] sm:$0xff]
    %v384 = vld [vmem:[#allocation5 + $0x908] sm:$0xff]
    %v385 = vld [vmem:[#allocation5 + $0x910] sm:$0xff]
    %v386 = vld [vmem:[#allocation5 + $0x918] sm:$0xff]
    %v387 = vld [vmem:[#allocation5 + $0x920] sm:$0xff]
    %v388 = vld [vmem:[#allocation5 + $0x928] sm:$0xff]
    %v389 = vld [vmem:[#allocation5 + $0x930] sm:$0xff]
    %v390 = vld [vmem:[#allocation5 + $0x938] sm:$0xff]
    %v391 = vld [vmem:[#allocation5 + $0x940] sm:$0xff]
    %v392 = vld [vmem:[#allocation5 + $0x948] sm:$0xff]
    %v393 = vld [vmem:[#allocation5 + $0x950] sm:$0xff]
    %v394 = vld [vmem:[#allocation5 + $0x958] sm:$0xff]
    %v395 = vld [vmem:[#allocation5 + $0x960] sm:$0xff]
    %v396 = vld [vmem:[#allocation5 + $0x968] sm:$0xff]
    %v397 = vld [vmem:[#allocation5 + $0x970] sm:$0xff]
    %v398 = vld [vmem:[#allocation5 + $0x978] sm:$0xff]
    %v399 = vld [vmem:[#allocation5 + $0x980] sm:$0xff]
    %v400 = vld [vmem:[#allocation5 + $0x988] sm:$0xff]
    %v401 = vld [vmem:[#allocation5 + $0x990] sm:$0xff]
    %v402 = vld [vmem:[#allocation5 + $0x998] sm:$0xff]
    %v403 = vld [vmem:[#allocation5 + $0x9a0] sm:$0xff]
    %v404 = vld [vmem:[#allocation5 + $0x9a8] sm:$0xff]
    %v405 = vld [vmem:[#allocation5 + $0x9b0] sm:$0xff]
    %v406 = vld [vmem:[#allocation5 + $0x9b8] sm:$0xff]
    %v407 = vld [vmem:[#allocation5 + $0x9c0] sm:$0xff]
    %v408 = vld [vmem:[#allocation5 + $0x9c8] sm:$0xff]
    %v409 = vld [vmem:[#allocation5 + $0x9d0] sm:$0xff]
    %v410 = vld [vmem:[#allocation5 + $0x9d8] sm:$0xff]
    %v411 = vld [vmem:[#allocation5 + $0x9e0] sm:$0xff]
    %v412 = vld [vmem:[#allocation5 + $0x9e8] sm:$0xff]
    %v413 = vld [vmem:[#allocation5 + $0x9f0] sm:$0xff]
    %v414 = vld [vmem:[#allocation5 + $0x9f8] sm:$0xff]
    %v415 = vld [vmem:[#allocation5 + $0xa00] sm:$0xff]
    %v416 = vld [vmem:[#allocation5 + $0xa08] sm:$0xff]
    %v417 = vld [vmem:[#allocation5 + $0xa10] sm:$0xff]
    %v418 = vld [vmem:[#allocation5 + $0xa18] sm:$0xff]
    %v419 = vld [vmem:[#allocation5 + $0xa20] sm:$0xff]
    %v420 = vld [vmem:[#allocation5 + $0xa28] sm:$0xff]
    %v421 = vld [vmem:[#allocation5 + $0xa30] sm:$0xff]
    %v422 = vld [vmem:[#allocation5 + $0xa38] sm:$0xff]
    %v423 = vld [vmem:[#allocation5 + $0xa40] sm:$0xff]
    %v424 = vld [vmem:[#allocation5 + $0xa48] sm:$0xff]
    %v425 = vld [vmem:[#allocation5 + $0xa50] sm:$0xff]
    %v426 = vld [vmem:[#allocation5 + $0xa58] sm:$0xff]
    %v427 = vld [vmem:[#allocation5 + $0xa60] sm:$0xff]
    %v428 = vld [vmem:[#allocation5 + $0xa68] sm:$0xff]
    %v429 = vld [vmem:[#allocation5 + $0xa70] sm:$0xff]
    %v430 = vld [vmem:[#allocation5 + $0xa78] sm:$0xff]
    %v431 = vld [vmem:[#allocation5 + $0xa80] sm:$0xff]
    %v432 = vld [vmem:[#allocation5 + $0xa88] sm:$0xff]
    %v433 = vld [vmem:[#allocation5 + $0xa90] sm:$0xff]
    %v434 = vld [vmem:[#allocation5 + $0xa98] sm:$0xff]
    %v435 = vld [vmem:[#allocation5 + $0xaa0] sm:$0xff]
    %v436 = vld [vmem:[#allocation5 + $0xaa8] sm:$0xff]
    %v437 = vld [vmem:[#allocation5 + $0xab0] sm:$0xff]
    %v438 = vld [vmem:[#allocation5 + $0xab8] sm:$0xff]
    %v439 = vld [vmem:[#allocation5 + $0xac0] sm:$0xff]
    %v440 = vld [vmem:[#allocation5 + $0xac8] sm:$0xff]
    %v441 = vld [vmem:[#allocation5 + $0xad0] sm:$0xff]
    %v442 = vld [vmem:[#allocation5 + $0xad8] sm:$0xff]
    %v443 = vld [vmem:[#allocation5 + $0xae0] sm:$0xff]
    %v444 = vld [vmem:[#allocation5 + $0xae8] sm:$0xff]
    %v445 = vld [vmem:[#allocation5 + $0xaf0] sm:$0xff]
    %v446 = vld [vmem:[#allocation5 + $0xaf8] sm:$0xff]
    %v447 = vld [vmem:[#allocation5 + $0xb00] sm:$0xff]
    %v448 = vld [vmem:[#allocation5 + $0xb08] sm:$0xff]
    %v449 = vld [vmem:[#allocation5 + $0xb10] sm:$0xff]
    %v450 = vld [vmem:[#allocation5 + $0xb18] sm:$0xff]
    %v451 = vld [vmem:[#allocation5 + $0xb20] sm:$0xff]
    %v452 = vld [vmem:[#allocation5 + $0xb28] sm:$0xff]
    %v453 = vld [vmem:[#allocation5 + $0xb30] sm:$0xff]
    %v454 = vld [vmem:[#allocation5 + $0xb38] sm:$0xff]
    %v455 = vld [vmem:[#allocation5 + $0xb40] sm:$0xff]
    %v456 = vld [vmem:[#allocation5 + $0xb48] sm:$0xff]
    %v457 = vld [vmem:[#allocation5 + $0xb50] sm:$0xff]
    %v458 = vld [vmem:[#allocation5 + $0xb58] sm:$0xff]
    %v459 = vld [vmem:[#allocation5 + $0xb60] sm:$0xff]
    %v460 = vld [vmem:[#allocation5 + $0xb68] sm:$0xff]
    %v461 = vld [vmem:[#allocation5 + $0xb70] sm:$0xff]
    %v462 = vld [vmem:[#allocation5 + $0xb78] sm:$0xff]
    %v463 = vld [vmem:[#allocation5 + $0xb80] sm:$0xff]
    %v464 = vld [vmem:[#allocation5 + $0xb88] sm:$0xff]
    %v465 = vld [vmem:[#allocation5 + $0xb90] sm:$0xff]
    %v466 = vld [vmem:[#allocation5 + $0xb98] sm:$0xff]
    %v467 = vld [vmem:[#allocation5 + $0xba0] sm:$0xff]
    %v468 = vld [vmem:[#allocation5 + $0xba8] sm:$0xff]
    %v469 = vld [vmem:[#allocation5 + $0xbb0] sm:$0xff]
    %v470 = vld [vmem:[#allocation5 + $0xbb8] sm:$0xff]
    %v471 = vld [vmem:[#allocation5 + $0xbc0] sm:$0xff]
    %v472 = vld [vmem:[#allocation5 + $0xbc8] sm:$0xff]
    %v473 = vld [vmem:[#allocation5 + $0xbd0] sm:$0xff]
    %v474 = vld [vmem:[#allocation5 + $0xbd8] sm:$0xff]
    %v475 = vld [vmem:[#allocation5 + $0xbe0] sm:$0xff]
    %v476 = vld [vmem:[#allocation5 + $0xbe8] sm:$0xff]
    %v477 = vld [vmem:[#allocation5 + $0xbf0] sm:$0xff]
    %v478 = vld [vmem:[#allocation5 + $0xbf8] sm:$0xff]
    %v479 = vld [vmem:[#allocation5 + $0xc00] sm:$0xff]
    %v480 = vld [vmem:[#allocation5 + $0xc08] sm:$0xff]
    %v481 = vld [vmem:[#allocation5 + $0xc10] sm:$0xff]
    %v482 = vld [vmem:[#allocation5 + $0xc18] sm:$0xff]
    %v483 = vld [vmem:[#allocation5 + $0xc20] sm:$0xff]
    %v484 = vld [vmem:[#allocation5 + $0xc28] sm:$0xff]
    %v485 = vld [vmem:[#allocation5 + $0xc30] sm:$0xff]
    %v486 = vld [vmem:[#allocation5 + $0xc38] sm:$0xff]
    %v487 = vld [vmem:[#allocation5 + $0xc40] sm:$0xff]
    %v488 = vld [vmem:[#allocation5 + $0xc48] sm:$0xff]
    %v489 = vld [vmem:[#allocation5 + $0xc50] sm:$0xff]
    %v490 = vld [vmem:[#allocation5 + $0xc58] sm:$0xff]
    %v491 = vld [vmem:[#allocation5 + $0xc60] sm:$0xff]
    %v492 = vld [vmem:[#allocation5 + $0xc68] sm:$0xff]
    %v493 = vld [vmem:[#allocation5 + $0xc70] sm:$0xff]
    %v494 = vld [vmem:[#allocation5 + $0xc78] sm:$0xff]
    %v495 = vld [vmem:[#allocation5 + $0xc80] sm:$0xff]
    %v496 = vld [vmem:[#allocation5 + $0xc88] sm:$0xff]
    %v497 = vld [vmem:[#allocation5 + $0xc90] sm:$0xff]
    %v498 = vld [vmem:[#allocation5 + $0xc98] sm:$0xff]
    %v499 = vld [vmem:[#allocation5 + $0xca0] sm:$0xff]
    %v500 = vld [vmem:[#allocation5 + $0xca8] sm:$0xff]
    %v501 = vld [vmem:[#allocation5 + $0xcb0] sm:$0xff]
    %v502 = vld [vmem:[#allocation5 + $0xcb8] sm:$0xff]
    %v503 = vld [vmem:[#allocation5 + $0xcc0] sm:$0xff]
    %v504 = vld [vmem:[#allocation5 + $0xcc8] sm:$0xff]
    %v505 = vld [vmem:[#allocation5 + $0xcd0] sm:$0xff]
    %v506 = vld [vmem:[#allocation5 + $0xcd8] sm:$0xff]
    %v507 = vld [vmem:[#allocation5 + $0xce0] sm:$0xff]
    %v508 = vld [vmem:[#allocation5 + $0xce8] sm:$0xff]
    %v509 = vld [vmem:[#allocation5 + $0xcf0] sm:$0xff]
    %v510 = vld [vmem:[#allocation5 + $0xcf8] sm:$0xff]
    %v511 = vld [vmem:[#allocation5 + $0xd00] sm:$0xff]
    %v512 = vld [vmem:[#allocation5 + $0xd08] sm:$0xff]
    %v513 = vld [vmem:[#allocation5 + $0xd10] sm:$0xff]
    %v514 = vld [vmem:[#allocation5 + $0xd18] sm:$0xff]
    %v515 = vld [vmem:[#allocation5 + $0xd20] sm:$0xff]
    %v516 = vld [vmem:[#allocation5 + $0xd28] sm:$0xff]
    %v517 = vld [vmem:[#allocation5 + $0xd30] sm:$0xff]
    %v518 = vld [vmem:[#allocation5 + $0xd38] sm:$0xff]
    %v519 = vld [vmem:[#allocation5 + $0xd40] sm:$0xff]
    %v520 = vld [vmem:[#allocation5 + $0xd48] sm:$0xff]
    %v521 = vld [vmem:[#allocation5 + $0xd50] sm:$0xff]
    %v522 = vld [vmem:[#allocation5 + $0xd58] sm:$0xff]
    %v523 = vld [vmem:[#allocation5 + $0xd60] sm:$0xff]
    %v524 = vld [vmem:[#allocation5 + $0xd68] sm:$0xff]
    %v525 = vld [vmem:[#allocation5 + $0xd70] sm:$0xff]
    %v526 = vld [vmem:[#allocation5 + $0xd78] sm:$0xff]
    %v527 = vld [vmem:[#allocation5 + $0xd80] sm:$0xff]
    %v528 = vld [vmem:[#allocation5 + $0xd88] sm:$0xff]
    %v529 = vld [vmem:[#allocation5 + $0xd90] sm:$0xff]
    %v530 = vld [vmem:[#allocation5 + $0xd98] sm:$0xff]
    %v531 = vld [vmem:[#allocation5 + $0xda0] sm:$0xff]
    %v532 = vld [vmem:[#allocation5 + $0xda8] sm:$0xff]
    %v533 = vld [vmem:[#allocation5 + $0xdb0] sm:$0xff]
    %v534 = vld [vmem:[#allocation5 + $0xdb8] sm:$0xff]
    %v535 = vld [vmem:[#allocation5 + $0xdc0] sm:$0xff]
    %v536 = vld [vmem:[#allocation5 + $0xdc8] sm:$0xff]
    %v537 = vld [vmem:[#allocation5 + $0xdd0] sm:$0xff]
    %v538 = vld [vmem:[#allocation5 + $0xdd8] sm:$0xff]
    %v539 = vld [vmem:[#allocation5 + $0xde0] sm:$0xff]
    %v540 = vld [vmem:[#allocation5 + $0xde8] sm:$0xff]
    %v541 = vld [vmem:[#allocation5 + $0xdf0] sm:$0xff]
    %v542 = vld [vmem:[#allocation5 + $0xdf8] sm:$0xff]
    %v543 = vld [vmem:[#allocation5 + $0xe00] sm:$0xff]
    %v544 = vld [vmem:[#allocation5 + $0xe08] sm:$0xff]
    %v545 = vld [vmem:[#allocation5 + $0xe10] sm:$0xff]
    %v546 = vld [vmem:[#allocation5 + $0xe18] sm:$0xff]
    %v547 = vld [vmem:[#allocation5 + $0xe20] sm:$0xff]
    %v548 = vld [vmem:[#allocation5 + $0xe28] sm:$0xff]
    %v549 = vld [vmem:[#allocation5 + $0xe30] sm:$0xff]
    %v550 = vld [vmem:[#allocation5 + $0xe38] sm:$0xff]
    %v551 = vld [vmem:[#allocation5 + $0xe40] sm:$0xff]
    %v552 = vld [vmem:[#allocation5 + $0xe48] sm:$0xff]
    %v553 = vld [vmem:[#allocation5 + $0xe50] sm:$0xff]
    %v554 = vld [vmem:[#allocation5 + $0xe58] sm:$0xff]
    %v555 = vld [vmem:[#allocation5 + $0xe60] sm:$0xff]
    %v556 = vld [vmem:[#allocation5 + $0xe68] sm:$0xff]
    %v557 = vld [vmem:[#allocation5 + $0xe70] sm:$0xff]
    %v558 = vld [vmem:[#allocation5 + $0xe78] sm:$0xff]
    %v559 = vld [vmem:[#allocation5 + $0xe80] sm:$0xff]
    %v560 = vld [vmem:[#allocation5 + $0xe88] sm:$0xff]
    %v561 = vld [vmem:[#allocation5 + $0xe90] sm:$0xff]
    %v562 = vld [vmem:[#allocation5 + $0xe98] sm:$0xff]
    %v563 = vld [vmem:[#allocation5 + $0xea0] sm:$0xff]
    %v564 = vld [vmem:[#allocation5 + $0xea8] sm:$0xff]
    %v565 = vld [vmem:[#allocation5 + $0xeb0] sm:$0xff]
    %v566 = vld [vmem:[#allocation5 + $0xeb8] sm:$0xff]
    %v567 = vld [vmem:[#allocation5 + $0xec0] sm:$0xff]
    %v568 = vld [vmem:[#allocation5 + $0xec8] sm:$0xff]
    %v569 = vld [vmem:[#allocation5 + $0xed0] sm:$0xff]
    %v570 = vld [vmem:[#allocation5 + $0xed8] sm:$0xff]
    %v571 = vld [vmem:[#allocation5 + $0xee0] sm:$0xff]
    %v572 = vld [vmem:[#allocation5 + $0xee8] sm:$0xff]
    %v573 = vld [vmem:[#allocation5 + $0xef0] sm:$0xff]
    %v574 = vld [vmem:[#allocation5 + $0xef8] sm:$0xff]
    %v575 = vld [vmem:[#allocation5 + $0xf00] sm:$0xff]
    %v576 = vld [vmem:[#allocation5 + $0xf08] sm:$0xff]
    %v577 = vld [vmem:[#allocation5 + $0xf10] sm:$0xff]
    %v578 = vld [vmem:[#allocation5 + $0xf18] sm:$0xff]
    %v579 = vld [vmem:[#allocation5 + $0xf20] sm:$0xff]
    %v580 = vld [vmem:[#allocation5 + $0xf28] sm:$0xff]
    %v581 = vld [vmem:[#allocation5 + $0xf30] sm:$0xff]
    %v582 = vld [vmem:[#allocation5 + $0xf38] sm:$0xff]
    %v583 = vld [vmem:[#allocation5 + $0xf40] sm:$0xff]
    %v584 = vld [vmem:[#allocation5 + $0xf48] sm:$0xff]
    %v585 = vld [vmem:[#allocation5 + $0xf50] sm:$0xff]
    %v586 = vld [vmem:[#allocation5 + $0xf58] sm:$0xff]
    %v587 = vld [vmem:[#allocation5 + $0xf60] sm:$0xff]
    %v588 = vld [vmem:[#allocation5 + $0xf68] sm:$0xff]
    %v589 = vld [vmem:[#allocation5 + $0xf70] sm:$0xff]
    %v590 = vld [vmem:[#allocation5 + $0xf78] sm:$0xff]
    %v591 = vld [vmem:[#allocation5 + $0xf80] sm:$0xff]
    %v592 = vld [vmem:[#allocation5 + $0xf88] sm:$0xff]
    %v593 = vld [vmem:[#allocation5 + $0xf90] sm:$0xff]
    %v594 = vld [vmem:[#allocation5 + $0xf98] sm:$0xff]
    %v595 = vld [vmem:[#allocation5 + $0xfa0] sm:$0xff]
    %v596 = vld [vmem:[#allocation5 + $0xfa8] sm:$0xff]
    %v597 = vld [vmem:[#allocation5 + $0xfb0] sm:$0xff]
    %v598 = vld [vmem:[#allocation5 + $0xfb8] sm:$0xff]
    %v599 = vld [vmem:[#allocation5 + $0xfc0] sm:$0xff]
    %v600 = vld [vmem:[#allocation5 + $0xfc8] sm:$0xff]
    %v601 = vld [vmem:[#allocation5 + $0xfd0] sm:$0xff]
    %v602 = vld [vmem:[#allocation5 + $0xfd8] sm:$0xff]
    %v603 = vld [vmem:[#allocation5 + $0xfe0] sm:$0xff]
    %v604 = vld [vmem:[#allocation5 + $0xfe8] sm:$0xff]
    %v605 = vld [vmem:[#allocation5 + $0xff0] sm:$0xff]
    %v606 = vld [vmem:[#allocation5 + $0xff8] sm:$0xff]
    %v607 = vld [vmem:[#allocation5 + $0x1000] sm:$0xff]
    %v608 = vld [vmem:[#allocation5 + $0x1008] sm:$0xff]
    %v609 = vld [vmem:[#allocation5 + $0x1010] sm:$0xff]
    %v610 = vld [vmem:[#allocation5 + $0x1018] sm:$0xff]
    %v611 = vld [vmem:[#allocation5 + $0x1020] sm:$0xff]
    %v612 = vld [vmem:[#allocation5 + $0x1028] sm:$0xff]
    %v613 = vld [vmem:[#allocation5 + $0x1030] sm:$0xff]
    %v614 = vld [vmem:[#allocation5 + $0x1038] sm:$0xff]
    %v615 = vld [vmem:[#allocation5 + $0x1040] sm:$0xff]
    %v616 = vld [vmem:[#allocation5 + $0x1048] sm:$0xff]
    %v617 = vld [vmem:[#allocation5 + $0x1050] sm:$0xff]
    %v618 = vld [vmem:[#allocation5 + $0x1058] sm:$0xff]
    %v619 = vld [vmem:[#allocation5 + $0x1060] sm:$0xff]
    %v620 = vld [vmem:[#allocation5 + $0x1068] sm:$0xff]
    %v621 = vld [vmem:[#allocation5 + $0x1070] sm:$0xff]
    %v622 = vld [vmem:[#allocation5 + $0x1078] sm:$0xff]
    %v623 = vld [vmem:[#allocation5 + $0x1080] sm:$0xff]
    %v624 = vld [vmem:[#allocation5 + $0x1088] sm:$0xff]
    %v625 = vld [vmem:[#allocation5 + $0x1090] sm:$0xff]
    %v626 = vld [vmem:[#allocation5 + $0x1098] sm:$0xff]
    %v627 = vld [vmem:[#allocation5 + $0x10a0] sm:$0xff]
    %v628 = vld [vmem:[#allocation5 + $0x10a8] sm:$0xff]
    %v629 = vld [vmem:[#allocation5 + $0x10b0] sm:$0xff]
    %v630 = vld [vmem:[#allocation5 + $0x10b8] sm:$0xff]
    %v631 = vld [vmem:[#allocation5 + $0x10c0] sm:$0xff]
    %v632 = vld [vmem:[#allocation5 + $0x10c8] sm:$0xff]
    %v633 = vld [vmem:[#allocation5 + $0x10d0] sm:$0xff]
    %v634 = vld [vmem:[#allocation5 + $0x10d8] sm:$0xff]
    %v635 = vld [vmem:[#allocation5 + $0x10e0] sm:$0xff]
    %v636 = vld [vmem:[#allocation5 + $0x10e8] sm:$0xff]
    %v637 = vld [vmem:[#allocation5 + $0x10f0] sm:$0xff]
    %v638 = vld [vmem:[#allocation5 + $0x10f8] sm:$0xff]
    %v639 = vld [vmem:[#allocation5 + $0x1100] sm:$0xff]
    %v640 = vld [vmem:[#allocation5 + $0x1108] sm:$0xff]
    %v641 = vld [vmem:[#allocation5 + $0x1110] sm:$0xff]
    %v642 = vld [vmem:[#allocation5 + $0x1118] sm:$0xff]
    %v643 = vld [vmem:[#allocation5 + $0x1120] sm:$0xff]
    %v644 = vld [vmem:[#allocation5 + $0x1128] sm:$0xff]
    %v645 = vld [vmem:[#allocation5 + $0x1130] sm:$0xff]
    %v646 = vld [vmem:[#allocation5 + $0x1138] sm:$0xff]
    %v647 = vld [vmem:[#allocation5 + $0x1140] sm:$0xff]
    %v648 = vld [vmem:[#allocation5 + $0x1148] sm:$0xff]
    %v649 = vld [vmem:[#allocation5 + $0x1150] sm:$0xff]
    %v650 = vld [vmem:[#allocation5 + $0x1158] sm:$0xff]
    %v651 = vld [vmem:[#allocation5 + $0x1160] sm:$0xff]
    %v652 = vld [vmem:[#allocation5 + $0x1168] sm:$0xff]
    %v653 = vld [vmem:[#allocation5 + $0x1170] sm:$0xff]
    %v654 = vld [vmem:[#allocation5 + $0x1178] sm:$0xff]
    %v655 = vld [vmem:[#allocation5 + $0x1180] sm:$0xff]
    %v656 = vld [vmem:[#allocation5 + $0x1188] sm:$0xff]
    %v657 = vld [vmem:[#allocation5 + $0x1190] sm:$0xff]
    %v658 = vld [vmem:[#allocation5 + $0x1198] sm:$0xff]
    %v659 = vld [vmem:[#allocation5 + $0x11a0] sm:$0xff]
    %v660 = vld [vmem:[#allocation5 + $0x11a8] sm:$0xff]
    %v661 = vld [vmem:[#allocation5 + $0x11b0] sm:$0xff]
    %v662 = vld [vmem:[#allocation5 + $0x11b8] sm:$0xff]
    %v663 = vld [vmem:[#allocation5 + $0x11c0] sm:$0xff]
    %v664 = vld [vmem:[#allocation5 + $0x11c8] sm:$0xff]
    %v665 = vld [vmem:[#allocation5 + $0x11d0] sm:$0xff]
    %v666 = vld [vmem:[#allocation5 + $0x11d8] sm:$0xff]
    %v667 = vld [vmem:[#allocation5 + $0x11e0] sm:$0xff]
    %v668 = vld [vmem:[#allocation5 + $0x11e8] sm:$0xff]
    %v669 = vld [vmem:[#allocation5 + $0x11f0] sm:$0xff]
    %v670 = vld [vmem:[#allocation5 + $0x11f8] sm:$0xff]
    %v671 = vld [vmem:[#allocation5 + $0x1200] sm:$0xff]
    %v672 = vld [vmem:[#allocation5 + $0x1208] sm:$0xff]
    %v673 = vld [vmem:[#allocation5 + $0x1210] sm:$0xff]
    %v674 = vld [vmem:[#allocation5 + $0x1218] sm:$0xff]
    %v675 = vld [vmem:[#allocation5 + $0x1220] sm:$0xff]
    %v676 = vld [vmem:[#allocation5 + $0x1228] sm:$0xff]
    %v677 = vld [vmem:[#allocation5 + $0x1230] sm:$0xff]
    %v678 = vld [vmem:[#allocation5 + $0x1238] sm:$0xff]
    %v679 = vld [vmem:[#allocation5 + $0x1240] sm:$0xff]
    %v680 = vld [vmem:[#allocation5 + $0x1248] sm:$0xff]
    %v681 = vld [vmem:[#allocation5 + $0x1250] sm:$0xff]
    %v682 = vld [vmem:[#allocation5 + $0x1258] sm:$0xff]
    %v683 = vld [vmem:[#allocation5 + $0x1260] sm:$0xff]
    %v684 = vld [vmem:[#allocation5 + $0x1268] sm:$0xff]
    %v685 = vld [vmem:[#allocation5 + $0x1270] sm:$0xff]
    %v686 = vld [vmem:[#allocation5 + $0x1278] sm:$0xff]
    %v687 = vld [vmem:[#allocation5 + $0x1280] sm:$0xff]
    %v688 = vld [vmem:[#allocation5 + $0x1288] sm:$0xff]
    %v689 = vld [vmem:[#allocation5 + $0x1290] sm:$0xff]
    %v690 = vld [vmem:[#allocation5 + $0x1298] sm:$0xff]
    %v691 = vld [vmem:[#allocation5 + $0x12a0] sm:$0xff]
    %v692 = vld [vmem:[#allocation5 + $0x12a8] sm:$0xff]
    %v693 = vld [vmem:[#allocation5 + $0x12b0] sm:$0xff]
    %v694 = vld [vmem:[#allocation5 + $0x12b8] sm:$0xff]
    %v695 = vld [vmem:[#allocation5 + $0x12c0] sm:$0xff]
    %v696 = vld [vmem:[#allocation5 + $0x12c8] sm:$0xff]
    %v697 = vld [vmem:[#allocation5 + $0x12d0] sm:$0xff]
    %v698 = vld [vmem:[#allocation5 + $0x12d8] sm:$0xff]
    %v699 = vld [vmem:[#allocation5 + $0x12e0] sm:$0xff]
    %v700 = vld [vmem:[#allocation5 + $0x12e8] sm:$0xff]
    %v701 = vld [vmem:[#allocation5 + $0x12f0] sm:$0xff]
    %v702 = vld [vmem:[#allocation5 + $0x12f8] sm:$0xff]
    %v703 = vld [vmem:[#allocation5 + $0x1300] sm:$0xff]
    %v704 = vld [vmem:[#allocation5 + $0x1308] sm:$0xff]
    %v705 = vld [vmem:[#allocation5 + $0x1310] sm:$0xff]
    %v706 = vld [vmem:[#allocation5 + $0x1318] sm:$0xff]
    %v707 = vld [vmem:[#allocation5 + $0x1320] sm:$0xff]
    %v708 = vld [vmem:[#allocation5 + $0x1328] sm:$0xff]
    %v709 = vld [vmem:[#allocation5 + $0x1330] sm:$0xff]
    %v710 = vld [vmem:[#allocation5 + $0x1338] sm:$0xff]
    %v711 = vld [vmem:[#allocation5 + $0x1340] sm:$0xff]
    %v712 = vld [vmem:[#allocation5 + $0x1348] sm:$0xff]
    %v713 = vld [vmem:[#allocation5 + $0x1350] sm:$0xff]
    %v714 = vld [vmem:[#allocation5 + $0x1358] sm:$0xff]
    %v715 = vld [vmem:[#allocation5 + $0x1360] sm:$0xff]
    %v716 = vld [vmem:[#allocation5 + $0x1368] sm:$0xff]
    %v717 = vld [vmem:[#allocation5 + $0x1370] sm:$0xff]
    %v718 = vld [vmem:[#allocation5 + $0x1378] sm:$0xff]
    %v719 = vld [vmem:[#allocation5 + $0x1380] sm:$0xff]
    %v720 = vld [vmem:[#allocation5 + $0x1388] sm:$0xff]
    %v721 = vld [vmem:[#allocation5 + $0x1390] sm:$0xff]
    %v722 = vld [vmem:[#allocation5 + $0x1398] sm:$0xff]
    %v723 = vld [vmem:[#allocation5 + $0x13a0] sm:$0xff]
    %v724 = vld [vmem:[#allocation5 + $0x13a8] sm:$0xff]
    %v725 = vld [vmem:[#allocation5 + $0x13b0] sm:$0xff]
    %v726 = vld [vmem:[#allocation5 + $0x13b8] sm:$0xff]
    %v727 = vld [vmem:[#allocation5 + $0x13c0] sm:$0xff]
    %v728 = vld [vmem:[#allocation5 + $0x13c8] sm:$0xff]
    %v729 = vld [vmem:[#allocation5 + $0x13d0] sm:$0xff]
    %v730 = vld [vmem:[#allocation5 + $0x13d8] sm:$0xff]
    %v731 = vld [vmem:[#allocation5 + $0x13e0] sm:$0xff]
    %v732 = vld [vmem:[#allocation5 + $0x13e8] sm:$0xff]
    %v733 = vld [vmem:[#allocation5 + $0x13f0] sm:$0xff]
    %v734 = vld [vmem:[#allocation5 + $0x13f8] sm:$0xff]
    %v735 = vld [vmem:[#allocation5 + $0x1400] sm:$0xff]
    %v736 = vld [vmem:[#allocation5 + $0x1408] sm:$0xff]
    %v737 = vld [vmem:[#allocation5 + $0x1410] sm:$0xff]
    %v738 = vld [vmem:[#allocation5 + $0x1418] sm:$0xff]
    %v739 = vld [vmem:[#allocation5 + $0x1420] sm:$0xff]
    %v740 = vld [vmem:[#allocation5 + $0x1428] sm:$0xff]
    %v741 = vld [vmem:[#allocation5 + $0x1430] sm:$0xff]
    %v742 = vld [vmem:[#allocation5 + $0x1438] sm:$0xff]
    %v743 = vld [vmem:[#allocation5 + $0x1440] sm:$0xff]
    %v744 = vld [vmem:[#allocation5 + $0x1448] sm:$0xff]
    %v745 = vld [vmem:[#allocation5 + $0x1450] sm:$0xff]
    %v746 = vld [vmem:[#allocation5 + $0x1458] sm:$0xff]
    %v747 = vld [vmem:[#allocation5 + $0x1460] sm:$0xff]
    %v748 = vld [vmem:[#allocation5 + $0x1468] sm:$0xff]
    %v749 = vld [vmem:[#allocation5 + $0x1470] sm:$0xff]
    %v750 = vld [vmem:[#allocation5 + $0x1478] sm:$0xff]
    %v751 = vld [vmem:[#allocation5 + $0x1480] sm:$0xff]
    %v752 = vld [vmem:[#allocation5 + $0x1488] sm:$0xff]
    %v753 = vld [vmem:[#allocation5 + $0x1490] sm:$0xff]
    %v754 = vld [vmem:[#allocation5 + $0x1498] sm:$0xff]
    %v755 = vld [vmem:[#allocation5 + $0x14a0] sm:$0xff]
    %v756 = vld [vmem:[#allocation5 + $0x14a8] sm:$0xff]
    %v757 = vld [vmem:[#allocation5 + $0x14b0] sm:$0xff]
    %v758 = vld [vmem:[#allocation5 + $0x14b8] sm:$0xff]
    %v759 = vld [vmem:[#allocation5 + $0x14c0] sm:$0xff]
    %v760 = vld [vmem:[#allocation5 + $0x14c8] sm:$0xff]
    %v761 = vld [vmem:[#allocation5 + $0x14d0] sm:$0xff]
    %v762 = vld [vmem:[#allocation5 + $0x14d8] sm:$0xff]
    %v763 = vld [vmem:[#allocation5 + $0x14e0] sm:$0xff]
    %v764 = vld [vmem:[#allocation5 + $0x14e8] sm:$0xff]
    %v765 = vld [vmem:[#allocation5 + $0x14f0] sm:$0xff]
    %v766 = vld [vmem:[#allocation5 + $0x14f8] sm:$0xff]
    %v767 = vld [vmem:[#allocation5 + $0x1500] sm:$0xff]
    %v768 = vld [vmem:[#allocation5 + $0x1508] sm:$0xff]
    %v769 = vld [vmem:[#allocation5 + $0x1510] sm:$0xff]
    %v770 = vld [vmem:[#allocation5 + $0x1518] sm:$0xff]
    %v771 = vld [vmem:[#allocation5 + $0x1520] sm:$0xff]
    %v772 = vld [vmem:[#allocation5 + $0x1528] sm:$0xff]
    %v773 = vld [vmem:[#allocation5 + $0x1530] sm:$0xff]
    %v774 = vld [vmem:[#allocation5 + $0x1538] sm:$0xff]
    %v775 = vld [vmem:[#allocation5 + $0x1540] sm:$0xff]
    %v776 = vld [vmem:[#allocation5 + $0x1548] sm:$0xff]
    %v777 = vld [vmem:[#allocation5 + $0x1550] sm:$0xff]
    %v778 = vld [vmem:[#allocation5 + $0x1558] sm:$0xff]
    %v779 = vld [vmem:[#allocation5 + $0x1560] sm:$0xff]
    %v780 = vld [vmem:[#allocation5 + $0x1568] sm:$0xff]
    %v781 = vld [vmem:[#allocation5 + $0x1570] sm:$0xff]
    %v782 = vld [vmem:[#allocation5 + $0x1578] sm:$0xff]
    %v783 = vld [vmem:[#allocation5 + $0x1580] sm:$0xff]
    %v784 = vld [vmem:[#allocation5 + $0x1588] sm:$0xff]
    %v785 = vld [vmem:[#allocation5 + $0x1590] sm:$0xff]
    %v786 = vld [vmem:[#allocation5 + $0x1598] sm:$0xff]
    %v787 = vld [vmem:[#allocation5 + $0x15a0] sm:$0xff]
    %v788 = vld [vmem:[#allocation5 + $0x15a8] sm:$0xff]
    %v789 = vld [vmem:[#allocation5 + $0x15b0] sm:$0xff]
    %v790 = vld [vmem:[#allocation5 + $0x15b8] sm:$0xff]
    %v791 = vld [vmem:[#allocation5 + $0x15c0] sm:$0xff]
    %v792 = vld [vmem:[#allocation5 + $0x15c8] sm:$0xff]
    %v793 = vld [vmem:[#allocation5 + $0x15d0] sm:$0xff]
    %v794 = vld [vmem:[#allocation5 + $0x15d8] sm:$0xff]
    %v795 = vld [vmem:[#allocation5 + $0x15e0] sm:$0xff]
    %v796 = vld [vmem:[#allocation5 + $0x15e8] sm:$0xff]
    %v797 = vld [vmem:[#allocation5 + $0x15f0] sm:$0xff]
    %v798 = vld [vmem:[#allocation5 + $0x15f8] sm:$0xff]
    %v799 = vld [vmem:[#allocation5 + $0x1600] sm:$0xff]
    %v800 = vld [vmem:[#allocation5 + $0x1608] sm:$0xff]
    %v801 = vld [vmem:[#allocation5 + $0x1610] sm:$0xff]
    %v802 = vld [vmem:[#allocation5 + $0x1618] sm:$0xff]
    %v803 = vld [vmem:[#allocation5 + $0x1620] sm:$0xff]
    %v804 = vld [vmem:[#allocation5 + $0x1628] sm:$0xff]
    %v805 = vld [vmem:[#allocation5 + $0x1630] sm:$0xff]
    %v806 = vld [vmem:[#allocation5 + $0x1638] sm:$0xff]
    %v807 = vld [vmem:[#allocation5 + $0x1640] sm:$0xff]
    %v808 = vld [vmem:[#allocation5 + $0x1648] sm:$0xff]
    %v809 = vld [vmem:[#allocation5 + $0x1650] sm:$0xff]
    %v810 = vld [vmem:[#allocation5 + $0x1658] sm:$0xff]
    %v811 = vld [vmem:[#allocation5 + $0x1660] sm:$0xff]
    %v812 = vld [vmem:[#allocation5 + $0x1668] sm:$0xff]
    %v813 = vld [vmem:[#allocation5 + $0x1670] sm:$0xff]
    %v814 = vld [vmem:[#allocation5 + $0x1678] sm:$0xff]
    %v815 = vld [vmem:[#allocation5 + $0x1680] sm:$0xff]
    %v816 = vld [vmem:[#allocation5 + $0x1688] sm:$0xff]
    %v817 = vld [vmem:[#allocation5 + $0x1690] sm:$0xff]
    %v818 = vld [vmem:[#allocation5 + $0x1698] sm:$0xff]
    %v819 = vld [vmem:[#allocation5 + $0x16a0] sm:$0xff]
    %v820 = vld [vmem:[#allocation5 + $0x16a8] sm:$0xff]
    %v821 = vld [vmem:[#allocation5 + $0x16b0] sm:$0xff]
    %v822 = vld [vmem:[#allocation5 + $0x16b8] sm:$0xff]
    %v823 = vld [vmem:[#allocation5 + $0x16c0] sm:$0xff]
    %v824 = vld [vmem:[#allocation5 + $0x16c8] sm:$0xff]
    %v825 = vld [vmem:[#allocation5 + $0x16d0] sm:$0xff]
    %v826 = vld [vmem:[#allocation5 + $0x16d8] sm:$0xff]
    %v827 = vld [vmem:[#allocation5 + $0x16e0] sm:$0xff]
    %v828 = vld [vmem:[#allocation5 + $0x16e8] sm:$0xff]
    %v829 = vld [vmem:[#allocation5 + $0x16f0] sm:$0xff]
    %v830 = vld [vmem:[#allocation5 + $0x16f8] sm:$0xff]
    %v831 = vld [vmem:[#allocation5 + $0x1700] sm:$0xff]
    %v832 = vld [vmem:[#allocation5 + $0x1708] sm:$0xff]
    %v833 = vld [vmem:[#allocation5 + $0x1710] sm:$0xff]
    %v834 = vld [vmem:[#allocation5 + $0x1718] sm:$0xff]
    %v835 = vld [vmem:[#allocation5 + $0x1720] sm:$0xff]
    %v836 = vld [vmem:[#allocation5 + $0x1728] sm:$0xff]
    %v837 = vld [vmem:[#allocation5 + $0x1730] sm:$0xff]
    %v838 = vld [vmem:[#allocation5 + $0x1738] sm:$0xff]
    %v839 = vld [vmem:[#allocation5 + $0x1740] sm:$0xff]
    %v840 = vld [vmem:[#allocation5 + $0x1748] sm:$0xff]
    %v841 = vld [vmem:[#allocation5 + $0x1750] sm:$0xff]
    %v842 = vld [vmem:[#allocation5 + $0x1758] sm:$0xff]
    %v843 = vld [vmem:[#allocation5 + $0x1760] sm:$0xff]
    %v844 = vld [vmem:[#allocation5 + $0x1768] sm:$0xff]
    %v845 = vld [vmem:[#allocation5 + $0x1770] sm:$0xff]
    %v846 = vld [vmem:[#allocation5 + $0x1778] sm:$0xff]
    %v847 = vld [vmem:[#allocation5 + $0x1780] sm:$0xff]
    %v848 = vld [vmem:[#allocation5 + $0x1788] sm:$0xff]
    %v849 = vld [vmem:[#allocation5 + $0x1790] sm:$0xff]
    %v850 = vld [vmem:[#allocation5 + $0x1798] sm:$0xff]
    %v851 = vld [vmem:[#allocation5 + $0x17a0] sm:$0xff]
    %v852 = vld [vmem:[#allocation5 + $0x17a8] sm:$0xff]
    %v853 = vld [vmem:[#allocation5 + $0x17b0] sm:$0xff]
    %v854 = vld [vmem:[#allocation5 + $0x17b8] sm:$0xff]
    %v855 = vld [vmem:[#allocation5 + $0x17c0] sm:$0xff]
    %v856 = vld [vmem:[#allocation5 + $0x17c8] sm:$0xff]
    %v857 = vld [vmem:[#allocation5 + $0x17d0] sm:$0xff]
    %v858 = vld [vmem:[#allocation5 + $0x17d8] sm:$0xff]
    %v859 = vld [vmem:[#allocation5 + $0x17e0] sm:$0xff]
    %v860 = vld [vmem:[#allocation5 + $0x17e8] sm:$0xff]
    %v861 = vld [vmem:[#allocation5 + $0x17f0] sm:$0xff]
    %v862 = vld [vmem:[#allocation5 + $0x17f8] sm:$0xff]
    %v863 = vld [vmem:[#allocation7] sm:$0xf]
    %v865 = vlaneseq
    %v866 = vshrl.u32 %v865, 7
    %v867 = vsub.s32 0, %v866
    %v868 = vrot.slane %v863, %v867
    %v869 = vlaneseq
    %v870 = vshrl.u32 %v869, 7
    %v871 = vsub.s32 1, %v870
    %v872 = vrot.slane %v863, %v871
    %v873 = vlaneseq
    %v874 = vshrl.u32 %v873, 7
    %v875 = vsub.s32 2, %v874
    %v876 = vrot.slane %v863, %v875
    %v877 = vlaneseq
    %v878 = vshrl.u32 %v877, 7
    %v879 = vsub.s32 3, %v878
    %v880 = vrot.slane %v863, %v879
    %885 = vmatprep.subr.mxu0 %v96
    %886 = vmatpush1.msra.mxu0 %v95
    %887 = vmatprep.subr.mxu0 %v100
    %888 = vmatpush1.msra.mxu0 %v99
    %889 = vmatprep.subr.mxu0 %v104
    %890 = vmatpush1.msra.mxu0 %v103
    %891 = vmatprep.subr.mxu0 %v108
    %892 = vmatpush1.msra.mxu0 %v107
    %893 = vmatprep.subr.mxu0 %v112
    %894 = vmatpush1.msra.mxu0 %v111
    %895 = vmatprep.subr.mxu0 %v116
    %896 = vmatpush1.msra.mxu0 %v115
    %897 = vmatprep.subr.mxu0 %v120
    %898 = vmatpush1.msra.mxu0 %v119
    %899 = vmatprep.subr.mxu0 %v124
    %900 = vmatpush1.msra.mxu0 %v123
    %901 = vmatprep.subr.mxu0 %v128
    %902 = vmatpush1.msra.mxu0 %v127
    %903 = vmatprep.subr.mxu0 %v132
    %904 = vmatpush1.msra.mxu0 %v131
    %905 = vmatprep.subr.mxu0 %v136
    %906 = vmatpush1.msra.mxu0 %v135
    %907 = vmatprep.subr.mxu0 %v140
    %908 = vmatpush1.msra.mxu0 %v139
    %909 = vmatprep.subr.mxu0 %v144
    %910 = vmatpush1.msra.mxu0 %v143
    %911 = vmatprep.subr.mxu0 %v148
    %912 = vmatpush1.msra.mxu0 %v147
    %913 = vmatprep.subr.mxu0 %v152
    %914 = vmatpush1.msra.mxu0 %v151
    %915 = vmatprep.subr.mxu0 %v156
    %916 = vmatpush1.msra.mxu0 %v155
    %917 = vmatprep.subr.mxu0 %v160
    %918 = vmatpush1.msra.mxu0 %v159
    %919 = vmatprep.subr.mxu0 %v164
    %920 = vmatpush1.msra.mxu0 %v163
    %921 = vmatprep.subr.mxu0 %v168
    %922 = vmatpush1.msra.mxu0 %v167
    %923 = vmatprep.subr.mxu0 %v172
    %924 = vmatpush1.msra.mxu0 %v171
    %925 = vmatprep.subr.mxu0 %v176
    %926 = vmatpush1.msra.mxu0 %v175
    %927 = vmatprep.subr.mxu0 %v180
    %928 = vmatpush1.msra.mxu0 %v179
    %929 = vmatprep.subr.mxu0 %v184
    %930 = vmatpush1.msra.mxu0 %v183
    %931 = vmatprep.subr.mxu0 %v188
    %932 = vmatpush1.msra.mxu0 %v187
    %933 = vmatprep.subr.mxu0 %v192
    %934 = vmatpush1.msra.mxu0 %v191
    %935 = vmatprep.subr.mxu0 %v196
    %936 = vmatpush1.msra.mxu0 %v195
    %937 = vmatprep.subr.mxu0 %v200
    %938 = vmatpush1.msra.mxu0 %v199
    %939 = vmatprep.subr.mxu0 %v204
    %940 = vmatpush1.msra.mxu0 %v203
    %941 = vmatprep.subr.mxu0 %v208
    %942 = vmatpush1.msra.mxu0 %v207
    %943 = vmatprep.subr.mxu0 %v212
    %944 = vmatpush1.msra.mxu0 %v211
    %945 = vmatprep.subr.mxu0 %v216
    %946 = vmatpush1.msra.mxu0 %v215
    %947 = vmatprep.subr.mxu0 %v220
    %948 = vmatpush1.msra.mxu0 %v219
    %949 = vmatprep.mubr.f32.mxu0 %v84
    %950 = vmatmul.mubr.f32.gmra.mrb[0].mxu0 %v83
    %v951 = vpop.f32.mrb[0].mxu0
    %v952 = vadd.f32 %v868, %v951
    %v953 = vpop.f32.mrb[0].mxu0
    %v954 = vadd.f32 %v872, %v953
    %955 = vdwg.mxu0
    %956 = vmatprep.subr.mxu0 %v224
    %957 = vmatpush1.msra.mxu0 %v223
    %958 = vmatprep.subr.mxu0 %v228
    %959 = vmatpush1.msra.mxu0 %v227
    %960 = vmatprep.subr.mxu0 %v232
    %961 = vmatpush1.msra.mxu0 %v231
    %962 = vmatprep.subr.mxu0 %v236
    %963 = vmatpush1.msra.mxu0 %v235
    %964 = vmatprep.subr.mxu0 %v240
    %965 = vmatpush1.msra.mxu0 %v239
    %966 = vmatprep.subr.mxu0 %v244
    %967 = vmatpush1.msra.mxu0 %v243
    %968 = vmatprep.subr.mxu0 %v248
    %969 = vmatpush1.msra.mxu0 %v247
    %970 = vmatprep.subr.mxu0 %v252
    %971 = vmatpush1.msra.mxu0 %v251
    %972 = vmatprep.subr.mxu0 %v256
    %973 = vmatpush1.msra.mxu0 %v255
    %974 = vmatprep.subr.mxu0 %v260
    %975 = vmatpush1.msra.mxu0 %v259
    %976 = vmatprep.subr.mxu0 %v264
    %977 = vmatpush1.msra.mxu0 %v263
    %978 = vmatprep.subr.mxu0 %v268
    %979 = vmatpush1.msra.mxu0 %v267
    %980 = vmatprep.subr.mxu0 %v272
    %981 = vmatpush1.msra.mxu0 %v271
    %982 = vmatprep.subr.mxu0 %v276
    %983 = vmatpush1.msra.mxu0 %v275
    %984 = vmatprep.subr.mxu0 %v280
    %985 = vmatpush1.msra.mxu0 %v279
    %986 = vmatprep.subr.mxu0 %v284
    %987 = vmatpush1.msra.mxu0 %v283
    %988 = vmatprep.subr.mxu0 %v288
    %989 = vmatpush1.msra.mxu0 %v287
    %990 = vmatprep.subr.mxu0 %v292
    %991 = vmatpush1.msra.mxu0 %v291
    %992 = vmatprep.subr.mxu0 %v296
    %993 = vmatpush1.msra.mxu0 %v295
    %994 = vmatprep.subr.mxu0 %v300
    %995 = vmatpush1.msra.mxu0 %v299
    %996 = vmatprep.subr.mxu0 %v304
    %997 = vmatpush1.msra.mxu0 %v303
    %998 = vmatprep.subr.mxu0 %v308
    %999 = vmatpush1.msra.mxu0 %v307
    %1000 = vmatprep.subr.mxu0 %v312
    %1001 = vmatpush1.msra.mxu0 %v311
    %1002 = vmatprep.subr.mxu0 %v316
    %1003 = vmatpush1.msra.mxu0 %v315
    %1004 = vmatprep.subr.mxu0 %v320
    %1005 = vmatpush1.msra.mxu0 %v319
    %1006 = vmatprep.subr.mxu0 %v324
    %1007 = vmatpush1.msra.mxu0 %v323
    %1008 = vmatprep.subr.mxu0 %v328
    %1009 = vmatpush1.msra.mxu0 %v327
    %1010 = vmatprep.subr.mxu0 %v332
    %1011 = vmatpush1.msra.mxu0 %v331
    %1012 = vmatprep.subr.mxu0 %v336
    %1013 = vmatpush1.msra.mxu0 %v335
    %1014 = vmatprep.subr.mxu0 %v340
    %1015 = vmatpush1.msra.mxu0 %v339
    %1016 = vmatprep.subr.mxu0 %v344
    %1017 = vmatpush1.msra.mxu0 %v343
    %1018 = vmatprep.subr.mxu0 %v348
    %1019 = vmatpush1.msra.mxu0 %v347
    %1020 = vmatprep.mubr.f32.mxu0 %v86
    %1021 = vmatmul.mubr.f32.gmra.mrb[0].mxu0 %v85
    %v1022 = vpop.f32.mrb[0].mxu0
    %v1023 = vadd.f32 %v952, %v1022
    %v1024 = vpop.f32.mrb[0].mxu0
    %v1025 = vadd.f32 %v954, %v1024
    %1026 = vdwg.mxu0
    %1027 = vmatprep.subr.mxu0 %v352
    %1028 = vmatpush1.msra.mxu0 %v351
    %1029 = vmatprep.subr.mxu0 %v356
    %1030 = vmatpush1.msra.mxu0 %v355
    %1031 = vmatprep.subr.mxu0 %v360
    %1032 = vmatpush1.msra.mxu0 %v359
    %1033 = vmatprep.subr.mxu0 %v364
    %1034 = vmatpush1.msra.mxu0 %v363
    %1035 = vmatprep.subr.mxu0 %v368
    %1036 = vmatpush1.msra.mxu0 %v367
    %1037 = vmatprep.subr.mxu0 %v372
    %1038 = vmatpush1.msra.mxu0 %v371
    %1039 = vmatprep.subr.mxu0 %v376
    %1040 = vmatpush1.msra.mxu0 %v375
    %1041 = vmatprep.subr.mxu0 %v380
    %1042 = vmatpush1.msra.mxu0 %v379
    %1043 = vmatprep.subr.mxu0 %v384
    %1044 = vmatpush1.msra.mxu0 %v383
    %1045 = vmatprep.subr.mxu0 %v388
    %1046 = vmatpush1.msra.mxu0 %v387
    %1047 = vmatprep.subr.mxu0 %v392
    %1048 = vmatpush1.msra.mxu0 %v391
    %1049 = vmatprep.subr.mxu0 %v396
    %1050 = vmatpush1.msra.mxu0 %v395
    %1051 = vmatprep.subr.mxu0 %v400
    %1052 = vmatpush1.msra.mxu0 %v399
    %1053 = vmatprep.subr.mxu0 %v404
    %1054 = vmatpush1.msra.mxu0 %v403
    %1055 = vmatprep.subr.mxu0 %v408
    %1056 = vmatpush1.msra.mxu0 %v407
    %1057 = vmatprep.subr.mxu0 %v412
    %1058 = vmatpush1.msra.mxu0 %v411
    %1059 = vmatprep.subr.mxu0 %v416
    %1060 = vmatpush1.msra.mxu0 %v415
    %1061 = vmatprep.subr.mxu0 %v420
    %1062 = vmatpush1.msra.mxu0 %v419
    %1063 = vmatprep.subr.mxu0 %v424
    %1064 = vmatpush1.msra.mxu0 %v423
    %1065 = vmatprep.subr.mxu0 %v428
    %1066 = vmatpush1.msra.mxu0 %v427
    %1067 = vmatprep.subr.mxu0 %v432
    %1068 = vmatpush1.msra.mxu0 %v431
    %1069 = vmatprep.subr.mxu0 %v436
    %1070 = vmatpush1.msra.mxu0 %v435
    %1071 = vmatprep.subr.mxu0 %v440
    %1072 = vmatpush1.msra.mxu0 %v439
    %1073 = vmatprep.subr.mxu0 %v444
    %1074 = vmatpush1.msra.mxu0 %v443
    %1075 = vmatprep.subr.mxu0 %v448
    %1076 = vmatpush1.msra.mxu0 %v447
    %1077 = vmatprep.subr.mxu0 %v452
    %1078 = vmatpush1.msra.mxu0 %v451
    %1079 = vmatprep.subr.mxu0 %v456
    %1080 = vmatpush1.msra.mxu0 %v455
    %1081 = vmatprep.subr.mxu0 %v460
    %1082 = vmatpush1.msra.mxu0 %v459
    %1083 = vmatprep.subr.mxu0 %v464
    %1084 = vmatpush1.msra.mxu0 %v463
    %1085 = vmatprep.subr.mxu0 %v468
    %1086 = vmatpush1.msra.mxu0 %v467
    %1087 = vmatprep.subr.mxu0 %v472
    %1088 = vmatpush1.msra.mxu0 %v471
    %1089 = vmatprep.subr.mxu0 %v476
    %1090 = vmatpush1.msra.mxu0 %v475
    %1091 = vmatprep.mubr.f32.mxu0 %v88
    %1092 = vmatmul.mubr.f32.gmra.mrb[0].mxu0 %v87
    %v1093 = vpop.f32.mrb[0].mxu0
    %v1094 = vadd.f32 %v1023, %v1093
    %v1095 = vpop.f32.mrb[0].mxu0
    %v1096 = vadd.f32 %v1025, %v1095
    %1097 = vdwg.mxu0
    %1098 = vmatprep.subr.mxu0 %v480
    %1099 = vmatpush1.msra.mxu0 %v479
    %1100 = vmatprep.subr.mxu0 %v484
    %1101 = vmatpush1.msra.mxu0 %v483
    %1102 = vmatprep.subr.mxu0 %v488
    %1103 = vmatpush1.msra.mxu0 %v487
    %1104 = vmatprep.subr.mxu0 %v492
    %1105 = vmatpush1.msra.mxu0 %v491
    %1106 = vmatprep.subr.mxu0 %v496
    %1107 = vmatpush1.msra.mxu0 %v495
    %1108 = vmatprep.subr.mxu0 %v500
    %1109 = vmatpush1.msra.mxu0 %v499
    %1110 = vmatprep.subr.mxu0 %v504
    %1111 = vmatpush1.msra.mxu0 %v503
    %1112 = vmatprep.subr.mxu0 %v508
    %1113 = vmatpush1.msra.mxu0 %v507
    %1114 = vmatprep.subr.mxu0 %v512
    %1115 = vmatpush1.msra.mxu0 %v511
    %1116 = vmatprep.subr.mxu0 %v516
    %1117 = vmatpush1.msra.mxu0 %v515
    %1118 = vmatprep.subr.mxu0 %v520
    %1119 = vmatpush1.msra.mxu0 %v519
    %1120 = vmatprep.subr.mxu0 %v524
    %1121 = vmatpush1.msra.mxu0 %v523
    %1122 = vmatprep.subr.mxu0 %v528
    %1123 = vmatpush1.msra.mxu0 %v527
    %1124 = vmatprep.subr.mxu0 %v532
    %1125 = vmatpush1.msra.mxu0 %v531
    %1126 = vmatprep.subr.mxu0 %v536
    %1127 = vmatpush1.msra.mxu0 %v535
    %1128 = vmatprep.subr.mxu0 %v540
    %1129 = vmatpush1.msra.mxu0 %v539
    %1130 = vmatprep.subr.mxu0 %v544
    %1131 = vmatpush1.msra.mxu0 %v543
    %1132 = vmatprep.subr.mxu0 %v548
    %1133 = vmatpush1.msra.mxu0 %v547
    %1134 = vmatprep.subr.mxu0 %v552
    %1135 = vmatpush1.msra.mxu0 %v551
    %1136 = vmatprep.subr.mxu0 %v556
    %1137 = vmatpush1.msra.mxu0 %v555
    %1138 = vmatprep.subr.mxu0 %v560
    %1139 = vmatpush1.msra.mxu0 %v559
    %1140 = vmatprep.subr.mxu0 %v564
    %1141 = vmatpush1.msra.mxu0 %v563
    %1142 = vmatprep.subr.mxu0 %v568
    %1143 = vmatpush1.msra.mxu0 %v567
    %1144 = vmatprep.subr.mxu0 %v572
    %1145 = vmatpush1.msra.mxu0 %v571
    %1146 = vmatprep.subr.mxu0 %v576
    %1147 = vmatpush1.msra.mxu0 %v575
    %1148 = vmatprep.subr.mxu0 %v580
    %1149 = vmatpush1.msra.mxu0 %v579
    %1150 = vmatprep.subr.mxu0 %v584
    %1151 = vmatpush1.msra.mxu0 %v583
    %1152 = vmatprep.subr.mxu0 %v588
    %1153 = vmatpush1.msra.mxu0 %v587
    %1154 = vmatprep.subr.mxu0 %v592
    %1155 = vmatpush1.msra.mxu0 %v591
    %1156 = vmatprep.subr.mxu0 %v596
    %1157 = vmatpush1.msra.mxu0 %v595
    %1158 = vmatprep.subr.mxu0 %v600
    %1159 = vmatpush1.msra.mxu0 %v599
    %1160 = vmatprep.subr.mxu0 %v604
    %1161 = vmatpush1.msra.mxu0 %v603
    %1162 = vmatprep.mubr.f32.mxu0 %v90
    %1163 = vmatmul.mubr.f32.gmra.mrb[0].mxu0 %v89
    %v1164 = vpop.f32.mrb[0].mxu0
    %v1165 = vadd.f32 %v1094, %v1164
    %v1166 = vpop.f32.mrb[0].mxu0
    %v1167 = vadd.f32 %v1096, %v1166
    %1168 = vdwg.mxu0
    %1169 = vmatprep.subr.mxu0 %v608
    %1170 = vmatpush1.msra.mxu0 %v607
    %1171 = vmatprep.subr.mxu0 %v612
    %1172 = vmatpush1.msra.mxu0 %v611
    %1173 = vmatprep.subr.mxu0 %v616
    %1174 = vmatpush1.msra.mxu0 %v615
    %1175 = vmatprep.subr.mxu0 %v620
    %1176 = vmatpush1.msra.mxu0 %v619
    %1177 = vmatprep.subr.mxu0 %v624
    %1178 = vmatpush1.msra.mxu0 %v623
    %1179 = vmatprep.subr.mxu0 %v628
    %1180 = vmatpush1.msra.mxu0 %v627
    %1181 = vmatprep.subr.mxu0 %v632
    %1182 = vmatpush1.msra.mxu0 %v631
    %1183 = vmatprep.subr.mxu0 %v636
    %1184 = vmatpush1.msra.mxu0 %v635
    %1185 = vmatprep.subr.mxu0 %v640
    %1186 = vmatpush1.msra.mxu0 %v639
    %1187 = vmatprep.subr.mxu0 %v644
    %1188 = vmatpush1.msra.mxu0 %v643
    %1189 = vmatprep.subr.mxu0 %v648
    %1190 = vmatpush1.msra.mxu0 %v647
    %1191 = vmatprep.subr.mxu0 %v652
    %1192 = vmatpush1.msra.mxu0 %v651
    %1193 = vmatprep.subr.mxu0 %v656
    %1194 = vmatpush1.msra.mxu0 %v655
    %1195 = vmatprep.subr.mxu0 %v660
    %1196 = vmatpush1.msra.mxu0 %v659
    %1197 = vmatprep.subr.mxu0 %v664
    %1198 = vmatpush1.msra.mxu0 %v663
    %1199 = vmatprep.subr.mxu0 %v668
    %1200 = vmatpush1.msra.mxu0 %v667
    %1201 = vmatprep.subr.mxu0 %v672
    %1202 = vmatpush1.msra.mxu0 %v671
    %1203 = vmatprep.subr.mxu0 %v676
    %1204 = vmatpush1.msra.mxu0 %v675
    %1205 = vmatprep.subr.mxu0 %v680
    %1206 = vmatpush1.msra.mxu0 %v679
    %1207 = vmatprep.subr.mxu0 %v684
    %1208 = vmatpush1.msra.mxu0 %v683
    %1209 = vmatprep.subr.mxu0 %v688
    %1210 = vmatpush1.msra.mxu0 %v687
    %1211 = vmatprep.subr.mxu0 %v692
    %1212 = vmatpush1.msra.mxu0 %v691
    %1213 = vmatprep.subr.mxu0 %v696
    %1214 = vmatpush1.msra.mxu0 %v695
    %1215 = vmatprep.subr.mxu0 %v700
    %1216 = vmatpush1.msra.mxu0 %v699
    %1217 = vmatprep.subr.mxu0 %v704
    %1218 = vmatpush1.msra.mxu0 %v703
    %1219 = vmatprep.subr.mxu0 %v708
    %1220 = vmatpush1.msra.mxu0 %v707
    %1221 = vmatprep.subr.mxu0 %v712
    %1222 = vmatpush1.msra.mxu0 %v711
    %1223 = vmatprep.subr.mxu0 %v716
    %1224 = vmatpush1.msra.mxu0 %v715
    %1225 = vmatprep.subr.mxu0 %v720
    %1226 = vmatpush1.msra.mxu0 %v719
    %1227 = vmatprep.subr.mxu0 %v724
    %1228 = vmatpush1.msra.mxu0 %v723
    %1229 = vmatprep.subr.mxu0 %v728
    %1230 = vmatpush1.msra.mxu0 %v727
    %1231 = vmatprep.subr.mxu0 %v732
    %1232 = vmatpush1.msra.mxu0 %v731
    %1233 = vmatprep.mubr.f32.mxu0 %v92
    %1234 = vmatmul.mubr.f32.gmra.mrb[0].mxu0 %v91
    %v1235 = vpop.f32.mrb[0].mxu0
    %v1236 = vadd.f32 %v1165, %v1235
    %v1237 = vpop.f32.mrb[0].mxu0
    %v1238 = vadd.f32 %v1167, %v1237
    %1239 = vdwg.mxu0
    %1240 = vmatprep.subr.mxu0 %v736
    %1241 = vmatpush1.msra.mxu0 %v735
    %1242 = vmatprep.subr.mxu0 %v740
    %1243 = vmatpush1.msra.mxu0 %v739
    %1244 = vmatprep.subr.mxu0 %v744
    %1245 = vmatpush1.msra.mxu0 %v743
    %1246 = vmatprep.subr.mxu0 %v748
    %1247 = vmatpush1.msra.mxu0 %v747
    %1248 = vmatprep.subr.mxu0 %v752
    %1249 = vmatpush1.msra.mxu0 %v751
    %1250 = vmatprep.subr.mxu0 %v756
    %1251 = vmatpush1.msra.mxu0 %v755
    %1252 = vmatprep.subr.mxu0 %v760
    %1253 = vmatpush1.msra.mxu0 %v759
    %1254 = vmatprep.subr.mxu0 %v764
    %1255 = vmatpush1.msra.mxu0 %v763
    %1256 = vmatprep.subr.mxu0 %v768
    %1257 = vmatpush1.msra.mxu0 %v767
    %1258 = vmatprep.subr.mxu0 %v772
    %1259 = vmatpush1.msra.mxu0 %v771
    %1260 = vmatprep.subr.mxu0 %v776
    %1261 = vmatpush1.msra.mxu0 %v775
    %1262 = vmatprep.subr.mxu0 %v780
    %1263 = vmatpush1.msra.mxu0 %v779
    %1264 = vmatprep.subr.mxu0 %v784
    %1265 = vmatpush1.msra.mxu0 %v783
    %1266 = vmatprep.subr.mxu0 %v788
    %1267 = vmatpush1.msra.mxu0 %v787
    %1268 = vmatprep.subr.mxu0 %v792
    %1269 = vmatpush1.msra.mxu0 %v791
    %1270 = vmatprep.subr.mxu0 %v796
    %1271 = vmatpush1.msra.mxu0 %v795
    %1272 = vmatprep.subr.mxu0 %v800
    %1273 = vmatpush1.msra.mxu0 %v799
    %1274 = vmatprep.subr.mxu0 %v804
    %1275 = vmatpush1.msra.mxu0 %v803
    %1276 = vmatprep.subr.mxu0 %v808
    %1277 = vmatpush1.msra.mxu0 %v807
    %1278 = vmatprep.subr.mxu0 %v812
    %1279 = vmatpush1.msra.mxu0 %v811
    %1280 = vmatprep.subr.mxu0 %v816
    %1281 = vmatpush1.msra.mxu0 %v815
    %1282 = vmatprep.subr.mxu0 %v820
    %1283 = vmatpush1.msra.mxu0 %v819
    %1284 = vmatprep.subr.mxu0 %v824
    %1285 = vmatpush1.msra.mxu0 %v823
    %1286 = vmatprep.subr.mxu0 %v828
    %1287 = vmatpush1.msra.mxu0 %v827
    %1288 = vmatprep.subr.mxu0 %v832
    %1289 = vmatpush1.msra.mxu0 %v831
    %1290 = vmatprep.subr.mxu0 %v836
    %1291 = vmatpush1.msra.mxu0 %v835
    %1292 = vmatprep.subr.mxu0 %v840
    %1293 = vmatpush1.msra.mxu0 %v839
    %1294 = vmatprep.subr.mxu0 %v844
    %1295 = vmatpush1.msra.mxu0 %v843
    %1296 = vmatprep.subr.mxu0 %v848
    %1297 = vmatpush1.msra.mxu0 %v847
    %1298 = vmatprep.subr.mxu0 %v852
    %1299 = vmatpush1.msra.mxu0 %v851
    %1300 = vmatprep.subr.mxu0 %v856
    %1301 = vmatpush1.msra.mxu0 %v855
    %1302 = vmatprep.subr.mxu0 %v860
    %1303 = vmatpush1.msra.mxu0 %v859
    %1304 = vmatprep.mubr.f32.mxu0 %v94
    %1305 = vmatmul.mubr.f32.gmra.mrb[0].mxu0 %v93
    %v1306 = vpop.f32.mrb[0].mxu0
    %v1307 = vadd.f32 %v1236, %v1306
    %v1308 = vpop.f32.mrb[0].mxu0
    %v1309 = vadd.f32 %v1238, %v1308
    %1310 = vdwg.mxu0
    %1311 = vmatprep.subr.mxu0 %v98
    %1312 = vmatpush1.msra.mxu0 %v97
    %1313 = vmatprep.subr.mxu0 %v102
    %1314 = vmatpush1.msra.mxu0 %v101
    %1315 = vmatprep.subr.mxu0 %v106
    %1316 = vmatpush1.msra.mxu0 %v105
    %1317 = vmatprep.subr.mxu0 %v110
    %1318 = vmatpush1.msra.mxu0 %v109
    %1319 = vmatprep.subr.mxu0 %v114
    %1320 = vmatpush1.msra.mxu0 %v113
    %1321 = vmatprep.subr.mxu0 %v118
    %1322 = vmatpush1.msra.mxu0 %v117
    %1323 = vmatprep.subr.mxu0 %v122
    %1324 = vmatpush1.msra.mxu0 %v121
    %1325 = vmatprep.subr.mxu0 %v126
    %1326 = vmatpush1.msra.mxu0 %v125
    %1327 = vmatprep.subr.mxu0 %v130
    %1328 = vmatpush1.msra.mxu0 %v129
    %1329 = vmatprep.subr.mxu0 %v134
    %1330 = vmatpush1.msra.mxu0 %v133
    %1331 = vmatprep.subr.mxu0 %v138
    %1332 = vmatpush1.msra.mxu0 %v137
    %1333 = vmatprep.subr.mxu0 %v142
    %1334 = vmatpush1.msra.mxu0 %v141
    %1335 = vmatprep.subr.mxu0 %v146
    %1336 = vmatpush1.msra.mxu0 %v145
    %1337 = vmatprep.subr.mxu0 %v150
    %1338 = vmatpush1.msra.mxu0 %v149
    %1339 = vmatprep.subr.mxu0 %v154
    %1340 = vmatpush1.msra.mxu0 %v153
    %1341 = vmatprep.subr.mxu0 %v158
    %1342 = vmatpush1.msra.mxu0 %v157
    %1343 = vmatprep.subr.mxu0 %v162
    %1344 = vmatpush1.msra.mxu0 %v161
    %1345 = vmatprep.subr.mxu0 %v166
    %1346 = vmatpush1.msra.mxu0 %v165
    %1347 = vmatprep.subr.mxu0 %v170
    %1348 = vmatpush1.msra.mxu0 %v169
    %1349 = vmatprep.subr.mxu0 %v174
    %1350 = vmatpush1.msra.mxu0 %v173
    %1351 = vmatprep.subr.mxu0 %v178
    %1352 = vmatpush1.msra.mxu0 %v177
    %1353 = vmatprep.subr.mxu0 %v182
    %1354 = vmatpush1.msra.mxu0 %v181
    %1355 = vmatprep.subr.mxu0 %v186
    %1356 = vmatpush1.msra.mxu0 %v185
    %1357 = vmatprep.subr.mxu0 %v190
    %1358 = vmatpush1.msra.mxu0 %v189
    %1359 = vmatprep.subr.mxu0 %v194
    %1360 = vmatpush1.msra.mxu0 %v193
    %1361 = vmatprep.subr.mxu0 %v198
    %1362 = vmatpush1.msra.mxu0 %v197
    %1363 = vmatprep.subr.mxu0 %v202
    %1364 = vmatpush1.msra.mxu0 %v201
    %1365 = vmatprep.subr.mxu0 %v206
    %1366 = vmatpush1.msra.mxu0 %v205
    %1367 = vmatprep.subr.mxu0 %v210
    %1368 = vmatpush1.msra.mxu0 %v209
    %1369 = vmatprep.subr.mxu0 %v214
    %1370 = vmatpush1.msra.mxu0 %v213
    %1371 = vmatprep.subr.mxu0 %v218
    %1372 = vmatpush1.msra.mxu0 %v217
    %1373 = vmatprep.subr.mxu0 %v222
    %1374 = vmatpush1.msra.mxu0 %v221
    %1375 = vmatprep.mubr.f32.mxu0 %v84
    %1376 = vmatmul.mubr.f32.gmra.mrb[0].mxu0 %v83
    %v1377 = vpop.f32.mrb[0].mxu0
    %v1378 = vadd.f32 %v876, %v1377
    %v1379 = vpop.f32.mrb[0].mxu0
    %v1380 = vadd.f32 %v880, %v1379
    %1381 = vdwg.mxu0
    %1382 = vmatprep.subr.mxu0 %v226
    %1383 = vmatpush1.msra.mxu0 %v225
    %1384 = vmatprep.subr.mxu0 %v230
    %1385 = vmatpush1.msra.mxu0 %v229
    %1386 = vmatprep.subr.mxu0 %v234
    %1387 = vmatpush1.msra.mxu0 %v233
    %1388 = vmatprep.subr.mxu0 %v238
    %1389 = vmatpush1.msra.mxu0 %v237
    %1390 = vmatprep.subr.mxu0 %v242
    %1391 = vmatpush1.msra.mxu0 %v241
    %1392 = vmatprep.subr.mxu0 %v246
    %1393 = vmatpush1.msra.mxu0 %v245
    %1394 = vmatprep.subr.mxu0 %v250
    %1395 = vmatpush1.msra.mxu0 %v249
    %1396 = vmatprep.subr.mxu0 %v254
    %1397 = vmatpush1.msra.mxu0 %v253
    %1398 = vmatprep.subr.mxu0 %v258
    %1399 = vmatpush1.msra.mxu0 %v257
    %1400 = vmatprep.subr.mxu0 %v262
    %1401 = vmatpush1.msra.mxu0 %v261
    %1402 = vmatprep.subr.mxu0 %v266
    %1403 = vmatpush1.msra.mxu0 %v265
    %1404 = vmatprep.subr.mxu0 %v270
    %1405 = vmatpush1.msra.mxu0 %v269
    %1406 = vmatprep.subr.mxu0 %v274
    %1407 = vmatpush1.msra.mxu0 %v273
    %1408 = vmatprep.subr.mxu0 %v278
    %1409 = vmatpush1.msra.mxu0 %v277
    %1410 = vmatprep.subr.mxu0 %v282
    %1411 = vmatpush1.msra.mxu0 %v281
    %1412 = vmatprep.subr.mxu0 %v286
    %1413 = vmatpush1.msra.mxu0 %v285
    %1414 = vmatprep.subr.mxu0 %v290
    %1415 = vmatpush1.msra.mxu0 %v289
    %1416 = vmatprep.subr.mxu0 %v294
    %1417 = vmatpush1.msra.mxu0 %v293
    %1418 = vmatprep.subr.mxu0 %v298
    %1419 = vmatpush1.msra.mxu0 %v297
    %1420 = vmatprep.subr.mxu0 %v302
    %1421 = vmatpush1.msra.mxu0 %v301
    %1422 = vmatprep.subr.mxu0 %v306
    %1423 = vmatpush1.msra.mxu0 %v305
    %1424 = vmatprep.subr.mxu0 %v310
    %1425 = vmatpush1.msra.mxu0 %v309
    %1426 = vmatprep.subr.mxu0 %v314
    %1427 = vmatpush1.msra.mxu0 %v313
    %1428 = vmatprep.subr.mxu0 %v318
    %1429 = vmatpush1.msra.mxu0 %v317
    %1430 = vmatprep.subr.mxu0 %v322
    %1431 = vmatpush1.msra.mxu0 %v321
    %1432 = vmatprep.subr.mxu0 %v326
    %1433 = vmatpush1.msra.mxu0 %v325
    %1434 = vmatprep.subr.mxu0 %v330
    %1435 = vmatpush1.msra.mxu0 %v329
    %1436 = vmatprep.subr.mxu0 %v334
    %1437 = vmatpush1.msra.mxu0 %v333
    %1438 = vmatprep.subr.mxu0 %v338
    %1439 = vmatpush1.msra.mxu0 %v337
    %1440 = vmatprep.subr.mxu0 %v342
    %1441 = vmatpush1.msra.mxu0 %v341
    %1442 = vmatprep.subr.mxu0 %v346
    %1443 = vmatpush1.msra.mxu0 %v345
    %1444 = vmatprep.subr.mxu0 %v350
    %1445 = vmatpush1.msra.mxu0 %v349
    %1446 = vmatprep.mubr.f32.mxu0 %v86
    %1447 = vmatmul.mubr.f32.gmra.mrb[0].mxu0 %v85
    %v1448 = vpop.f32.mrb[0].mxu0
    %v1449 = vadd.f32 %v1378, %v1448
    %v1450 = vpop.f32.mrb[0].mxu0
    %v1451 = vadd.f32 %v1380, %v1450
    %1452 = vdwg.mxu0
    %1453 = vmatprep.subr.mxu0 %v354
    %1454 = vmatpush1.msra.mxu0 %v353
    %1455 = vmatprep.subr.mxu0 %v358
    %1456 = vmatpush1.msra.mxu0 %v357
    %1457 = vmatprep.subr.mxu0 %v362
    %1458 = vmatpush1.msra.mxu0 %v361
    %1459 = vmatprep.subr.mxu0 %v366
    %1460 = vmatpush1.msra.mxu0 %v365
    %1461 = vmatprep.subr.mxu0 %v370
    %1462 = vmatpush1.msra.mxu0 %v369
    %1463 = vmatprep.subr.mxu0 %v374
    %1464 = vmatpush1.msra.mxu0 %v373
    %1465 = vmatprep.subr.mxu0 %v378
    %1466 = vmatpush1.msra.mxu0 %v377
    %1467 = vmatprep.subr.mxu0 %v382
    %1468 = vmatpush1.msra.mxu0 %v381
    %1469 = vmatprep.subr.mxu0 %v386
    %1470 = vmatpush1.msra.mxu0 %v385
    %1471 = vmatprep.subr.mxu0 %v390
    %1472 = vmatpush1.msra.mxu0 %v389
    %1473 = vmatprep.subr.mxu0 %v394
    %1474 = vmatpush1.msra.mxu0 %v393
    %1475 = vmatprep.subr.mxu0 %v398
    %1476 = vmatpush1.msra.mxu0 %v397
    %1477 = vmatprep.subr.mxu0 %v402
    %1478 = vmatpush1.msra.mxu0 %v401
    %1479 = vmatprep.subr.mxu0 %v406
    %1480 = vmatpush1.msra.mxu0 %v405
    %1481 = vmatprep.subr.mxu0 %v410
    %1482 = vmatpush1.msra.mxu0 %v409
    %1483 = vmatprep.subr.mxu0 %v414
    %1484 = vmatpush1.msra.mxu0 %v413
    %1485 = vmatprep.subr.mxu0 %v418
    %1486 = vmatpush1.msra.mxu0 %v417
    %1487 = vmatprep.subr.mxu0 %v422
    %1488 = vmatpush1.msra.mxu0 %v421
    %1489 = vmatprep.subr.mxu0 %v426
    %1490 = vmatpush1.msra.mxu0 %v425
    %1491 = vmatprep.subr.mxu0 %v430
    %1492 = vmatpush1.msra.mxu0 %v429
    %1493 = vmatprep.subr.mxu0 %v434
    %1494 = vmatpush1.msra.mxu0 %v433
    %1495 = vmatprep.subr.mxu0 %v438
    %1496 = vmatpush1.msra.mxu0 %v437
    %1497 = vmatprep.subr.mxu0 %v442
    %1498 = vmatpush1.msra.mxu0 %v441
    %1499 = vmatprep.subr.mxu0 %v446
    %1500 = vmatpush1.msra.mxu0 %v445
    %1501 = vmatprep.subr.mxu0 %v450
    %1502 = vmatpush1.msra.mxu0 %v449
    %1503 = vmatprep.subr.mxu0 %v454
    %1504 = vmatpush1.msra.mxu0 %v453
    %1505 = vmatprep.subr.mxu0 %v458
    %1506 = vmatpush1.msra.mxu0 %v457
    %1507 = vmatprep.subr.mxu0 %v462
    %1508 = vmatpush1.msra.mxu0 %v461
    %1509 = vmatprep.subr.mxu0 %v466
    %1510 = vmatpush1.msra.mxu0 %v465
    %1511 = vmatprep.subr.mxu0 %v470
    %1512 = vmatpush1.msra.mxu0 %v469
    %1513 = vmatprep.subr.mxu0 %v474
    %1514 = vmatpush1.msra.mxu0 %v473
    %1515 = vmatprep.subr.mxu0 %v478
    %1516 = vmatpush1.msra.mxu0 %v477
    %1517 = vmatprep.mubr.f32.mxu0 %v88
    %1518 = vmatmul.mubr.f32.gmra.mrb[0].mxu0 %v87
    %v1519 = vpop.f32.mrb[0].mxu0
    %v1520 = vadd.f32 %v1449, %v1519
    %v1521 = vpop.f32.mrb[0].mxu0
    %v1522 = vadd.f32 %v1451, %v1521
    %1523 = vdwg.mxu0
    %1524 = vmatprep.subr.mxu0 %v482
    %1525 = vmatpush1.msra.mxu0 %v481
    %1526 = vmatprep.subr.mxu0 %v486
    %1527 = vmatpush1.msra.mxu0 %v485
    %1528 = vmatprep.subr.mxu0 %v490
    %1529 = vmatpush1.msra.mxu0 %v489
    %1530 = vmatprep.subr.mxu0 %v494
    %1531 = vmatpush1.msra.mxu0 %v493
    %1532 = vmatprep.subr.mxu0 %v498
    %1533 = vmatpush1.msra.mxu0 %v497
    %1534 = vmatprep.subr.mxu0 %v502
    %1535 = vmatpush1.msra.mxu0 %v501
    %1536 = vmatprep.subr.mxu0 %v506
    %1537 = vmatpush1.msra.mxu0 %v505
    %1538 = vmatprep.subr.mxu0 %v510
    %1539 = vmatpush1.msra.mxu0 %v509
    %1540 = vmatprep.subr.mxu0 %v514
    %1541 = vmatpush1.msra.mxu0 %v513
    %1542 = vmatprep.subr.mxu0 %v518
    %1543 = vmatpush1.msra.mxu0 %v517
    %1544 = vmatprep.subr.mxu0 %v522
    %1545 = vmatpush1.msra.mxu0 %v521
    %1546 = vmatprep.subr.mxu0 %v526
    %1547 = vmatpush1.msra.mxu0 %v525
    %1548 = vmatprep.subr.mxu0 %v530
    %1549 = vmatpush1.msra.mxu0 %v529
    %1550 = vmatprep.subr.mxu0 %v534
    %1551 = vmatpush1.msra.mxu0 %v533
    %1552 = vmatprep.subr.mxu0 %v538
    %1553 = vmatpush1.msra.mxu0 %v537
    %1554 = vmatprep.subr.mxu0 %v542
    %1555 = vmatpush1.msra.mxu0 %v541
    %1556 = vmatprep.subr.mxu0 %v546
    %1557 = vmatpush1.msra.mxu0 %v545
    %1558 = vmatprep.subr.mxu0 %v550
    %1559 = vmatpush1.msra.mxu0 %v549
    %1560 = vmatprep.subr.mxu0 %v554
    %1561 = vmatpush1.msra.mxu0 %v553
    %1562 = vmatprep.subr.mxu0 %v558
    %1563 = vmatpush1.msra.mxu0 %v557
    %1564 = vmatprep.subr.mxu0 %v562
    %1565 = vmatpush1.msra.mxu0 %v561
    %1566 = vmatprep.subr.mxu0 %v566
    %1567 = vmatpush1.msra.mxu0 %v565
    %1568 = vmatprep.subr.mxu0 %v570
    %1569 = vmatpush1.msra.mxu0 %v569
    %1570 = vmatprep.subr.mxu0 %v574
    %1571 = vmatpush1.msra.mxu0 %v573
    %1572 = vmatprep.subr.mxu0 %v578
    %1573 = vmatpush1.msra.mxu0 %v577
    %1574 = vmatprep.subr.mxu0 %v582
    %1575 = vmatpush1.msra.mxu0 %v581
    %1576 = vmatprep.subr.mxu0 %v586
    %1577 = vmatpush1.msra.mxu0 %v585
    %1578 = vmatprep.subr.mxu0 %v590
    %1579 = vmatpush1.msra.mxu0 %v589
    %1580 = vmatprep.subr.mxu0 %v594
    %1581 = vmatpush1.msra.mxu0 %v593
    %1582 = vmatprep.subr.mxu0 %v598
    %1583 = vmatpush1.msra.mxu0 %v597
    %1584 = vmatprep.subr.mxu0 %v602
    %1585 = vmatpush1.msra.mxu0 %v601
    %1586 = vmatprep.subr.mxu0 %v606
    %1587 = vmatpush1.msra.mxu0 %v605
    %1588 = vmatprep.mubr.f32.mxu0 %v90
    %1589 = vmatmul.mubr.f32.gmra.mrb[0].mxu0 %v89
    %v1590 = vpop.f32.mrb[0].mxu0
    %v1591 = vadd.f32 %v1520, %v1590
    %v1592 = vpop.f32.mrb[0].mxu0
    %v1593 = vadd.f32 %v1522, %v1592
    %1594 = vdwg.mxu0
    %1595 = vmatprep.subr.mxu0 %v610
    %1596 = vmatpush1.msra.mxu0 %v609
    %1597 = vmatprep.subr.mxu0 %v614
    %1598 = vmatpush1.msra.mxu0 %v613
    %1599 = vmatprep.subr.mxu0 %v618
    %1600 = vmatpush1.msra.mxu0 %v617
    %1601 = vmatprep.subr.mxu0 %v622
    %1602 = vmatpush1.msra.mxu0 %v621
    %1603 = vmatprep.subr.mxu0 %v626
    %1604 = vmatpush1.msra.mxu0 %v625
    %1605 = vmatprep.subr.mxu0 %v630
    %1606 = vmatpush1.msra.mxu0 %v629
    %1607 = vmatprep.subr.mxu0 %v634
    %1608 = vmatpush1.msra.mxu0 %v633
    %1609 = vmatprep.subr.mxu0 %v638
    %1610 = vmatpush1.msra.mxu0 %v637
    %1611 = vmatprep.subr.mxu0 %v642
    %1612 = vmatpush1.msra.mxu0 %v641
    %1613 = vmatprep.subr.mxu0 %v646
    %1614 = vmatpush1.msra.mxu0 %v645
    %1615 = vmatprep.subr.mxu0 %v650
    %1616 = vmatpush1.msra.mxu0 %v649
    %1617 = vmatprep.subr.mxu0 %v654
    %1618 = vmatpush1.msra.mxu0 %v653
    %1619 = vmatprep.subr.mxu0 %v658
    %1620 = vmatpush1.msra.mxu0 %v657
    %1621 = vmatprep.subr.mxu0 %v662
    %1622 = vmatpush1.msra.mxu0 %v661
    %1623 = vmatprep.subr.mxu0 %v666
    %1624 = vmatpush1.msra.mxu0 %v665
    %1625 = vmatprep.subr.mxu0 %v670
    %1626 = vmatpush1.msra.mxu0 %v669
    %1627 = vmatprep.subr.mxu0 %v674
    %1628 = vmatpush1.msra.mxu0 %v673
    %1629 = vmatprep.subr.mxu0 %v678
    %1630 = vmatpush1.msra.mxu0 %v677
    %1631 = vmatprep.subr.mxu0 %v682
    %1632 = vmatpush1.msra.mxu0 %v681
    %1633 = vmatprep.subr.mxu0 %v686
    %1634 = vmatpush1.msra.mxu0 %v685
    %1635 = vmatprep.subr.mxu0 %v690
    %1636 = vmatpush1.msra.mxu0 %v689
    %1637 = vmatprep.subr.mxu0 %v694
    %1638 = vmatpush1.msra.mxu0 %v693
    %1639 = vmatprep.subr.mxu0 %v698
    %1640 = vmatpush1.msra.mxu0 %v697
    %1641 = vmatprep.subr.mxu0 %v702
    %1642 = vmatpush1.msra.mxu0 %v701
    %1643 = vmatprep.subr.mxu0 %v706
    %1644 = vmatpush1.msra.mxu0 %v705
    %1645 = vmatprep.subr.mxu0 %v710
    %1646 = vmatpush1.msra.mxu0 %v709
    %1647 = vmatprep.subr.mxu0 %v714
    %1648 = vmatpush1.msra.mxu0 %v713
    %1649 = vmatprep.subr.mxu0 %v718
    %1650 = vmatpush1.msra.mxu0 %v717
    %1651 = vmatprep.subr.mxu0 %v722
    %1652 = vmatpush1.msra.mxu0 %v721
    %1653 = vmatprep.subr.mxu0 %v726
    %1654 = vmatpush1.msra.mxu0 %v725
    %1655 = vmatprep.subr.mxu0 %v730
    %1656 = vmatpush1.msra.mxu0 %v729
    %1657 = vmatprep.subr.mxu0 %v734
    %1658 = vmatpush1.msra.mxu0 %v733
    %1659 = vmatprep.mubr.f32.mxu0 %v92
    %1660 = vmatmul.mubr.f32.gmra.mrb[0].mxu0 %v91
    %v1661 = vpop.f32.mrb[0].mxu0
    %v1662 = vadd.f32 %v1591, %v1661
    %v1663 = vpop.f32.mrb[0].mxu0
    %v1664 = vadd.f32 %v1593, %v1663
    %1665 = vdwg.mxu0
    %1666 = vmatprep.subr.mxu0 %v738
    %1667 = vmatpush1.msra.mxu0 %v737
    %1668 = vmatprep.subr.mxu0 %v742
    %1669 = vmatpush1.msra.mxu0 %v741
    %1670 = vmatprep.subr.mxu0 %v746
    %1671 = vmatpush1.msra.mxu0 %v745
    %1672 = vmatprep.subr.mxu0 %v750
    %1673 = vmatpush1.msra.mxu0 %v749
    %1674 = vmatprep.subr.mxu0 %v754
    %1675 = vmatpush1.msra.mxu0 %v753
    %1676 = vmatprep.subr.mxu0 %v758
    %1677 = vmatpush1.msra.mxu0 %v757
    %1678 = vmatprep.subr.mxu0 %v762
    %1679 = vmatpush1.msra.mxu0 %v761
    %1680 = vmatprep.subr.mxu0 %v766
    %1681 = vmatpush1.msra.mxu0 %v765
    %1682 = vmatprep.subr.mxu0 %v770
    %1683 = vmatpush1.msra.mxu0 %v769
    %1684 = vmatprep.subr.mxu0 %v774
    %1685 = vmatpush1.msra.mxu0 %v773
    %1686 = vmatprep.subr.mxu0 %v778
    %1687 = vmatpush1.msra.mxu0 %v777
    %1688 = vmatprep.subr.mxu0 %v782
    %1689 = vmatpush1.msra.mxu0 %v781
    %1690 = vmatprep.subr.mxu0 %v786
    %1691 = vmatpush1.msra.mxu0 %v785
    %1692 = vmatprep.subr.mxu0 %v790
    %1693 = vmatpush1.msra.mxu0 %v789
    %1694 = vmatprep.subr.mxu0 %v794
    %1695 = vmatpush1.msra.mxu0 %v793
    %1696 = vmatprep.subr.mxu0 %v798
    %1697 = vmatpush1.msra.mxu0 %v797
    %1698 = vmatprep.subr.mxu0 %v802
    %1699 = vmatpush1.msra.mxu0 %v801
    %1700 = vmatprep.subr.mxu0 %v806
    %1701 = vmatpush1.msra.mxu0 %v805
    %1702 = vmatprep.subr.mxu0 %v810
    %1703 = vmatpush1.msra.mxu0 %v809
    %1704 = vmatprep.subr.mxu0 %v814
    %1705 = vmatpush1.msra.mxu0 %v813
    %1706 = vmatprep.subr.mxu0 %v818
    %1707 = vmatpush1.msra.mxu0 %v817
    %1708 = vmatprep.subr.mxu0 %v822
    %1709 = vmatpush1.msra.mxu0 %v821
    %1710 = vmatprep.subr.mxu0 %v826
    %1711 = vmatpush1.msra.mxu0 %v825
    %1712 = vmatprep.subr.mxu0 %v830
    %1713 = vmatpush1.msra.mxu0 %v829
    %1714 = vmatprep.subr.mxu0 %v834
    %1715 = vmatpush1.msra.mxu0 %v833
    %1716 = vmatprep.subr.mxu0 %v838
    %1717 = vmatpush1.msra.mxu0 %v837
    %1718 = vmatprep.subr.mxu0 %v842
    %1719 = vmatpush1.msra.mxu0 %v841
    %1720 = vmatprep.subr.mxu0 %v846
    %1721 = vmatpush1.msra.mxu0 %v845
    %1722 = vmatprep.subr.mxu0 %v850
    %1723 = vmatpush1.msra.mxu0 %v849
    %1724 = vmatprep.subr.mxu0 %v854
    %1725 = vmatpush1.msra.mxu0 %v853
    %1726 = vmatprep.subr.mxu0 %v858
    %1727 = vmatpush1.msra.mxu0 %v857
    %1728 = vmatprep.subr.mxu0 %v862
    %1729 = vmatpush1.msra.mxu0 %v861
    %1730 = vmatprep.mubr.f32.mxu0 %v94
    %1731 = vmatmul.mubr.f32.gmra.mrb[0].mxu0 %v93
    %v1732 = vpop.f32.mrb[0].mxu0
    %v1733 = vadd.f32 %v1662, %v1732
    %v1734 = vpop.f32.mrb[0].mxu0
    %v1735 = vadd.f32 %v1664, %v1734
    %1736 = vdwg.mxu0
    %vm1737 = vcmp.gt.f32.partialorder 0.0, 0.0
    %v1738 = vadd.f32 %v1307, 0.0
    %v1739 = vadd.f32 %v1309, 0.0
    %v1740 = vadd.f32 %v1733, 0.0
    %v1741 = vadd.f32 %v1735, 0.0
    %v1742 = vsel %vm1737, %v1307, %v1738
    %v1743 = vsel %vm1737, %v1309, %v1739
    %v1744 = vsel %vm1737, %v1733, %v1740
    %v1745 = vsel %vm1737, %v1735, %v1741
    %vm1746 = vcmp.gt.f32.partialorder %v1742, 0.3
    %vm1747 = vcmp.gt.f32.partialorder %v1743, 0.3
    %vm1748 = vcmp.gt.f32.partialorder %v1744, 0.3
    %vm1749 = vcmp.gt.f32.partialorder %v1745, 0.3
    %v1750 = vsel %vm1746, 1, 0
    %v1751 = vsel %vm1747, 1, 0
    %v1752 = vsel %vm1748, 1, 0
    %v1753 = vsel %vm1749, 1, 0
    %v1754 = vcvt.s32.f32 %v1750
    %v1755 = vcvt.s32.f32 %v1751
    %v1756 = vcvt.s32.f32 %v1752
    %v1757 = vcvt.s32.f32 %v1753
    %v1758 = vadd.f32 %v1754, 0.0
    %v1759 = vadd.f32 %v1755, 0.0
    %v1760 = vadd.f32 %v1756, 0.0
    %v1761 = vadd.f32 %v1757, 0.0
    %vm1762 = vcmp.gt.f32.partialorder %v1754, 0.0
    %vm1763 = vcmp.gt.f32.partialorder %v1755, 0.0
    %vm1764 = vcmp.gt.f32.partialorder %v1756, 0.0
    %vm1765 = vcmp.gt.f32.partialorder %v1757, 0.0
    %v1766 = vmul.f32 %v1742, 0.2
    %v1767 = vmul.f32 %v1743, 0.2
    %v1768 = vmul.f32 %v1744, 0.2
    %v1769 = vmul.f32 %v1745, 0.2
    %v1770 = vadd.f32 %v1766, %v1307
    %v1771 = vadd.f32 %v1767, %v1309
    %v1772 = vadd.f32 %v1768, %v1733
    %v1773 = vadd.f32 %v1769, %v1735
    %v1774 = vsel %vm1762, %v1307, %v1770
    %v1775 = vsel %vm1763, %v1309, %v1771
    %v1776 = vsel %vm1764, %v1733, %v1772
    %v1777 = vsel %vm1765, %v1735, %v1773
    %vm1778 = vcmp.gt.f32.partialorder %v1774, 0.3
    %vm1779 = vcmp.gt.f32.partialorder %v1775, 0.3
    %vm1780 = vcmp.gt.f32.partialorder %v1776, 0.3
    %vm1781 = vcmp.gt.f32.partialorder %v1777, 0.3
    %v1782 = vsel %vm1778, 1, 0
    %v1783 = vsel %vm1779, 1, 0
    %v1784 = vsel %vm1780, 1, 0
    %v1785 = vsel %vm1781, 1, 0
    %v1786 = vcvt.s32.f32 %v1782
    %v1787 = vcvt.s32.f32 %v1783
    %v1788 = vcvt.s32.f32 %v1784
    %v1789 = vcvt.s32.f32 %v1785
    %v1790 = vadd.f32 %v1758, %v1786
    %v1791 = vadd.f32 %v1759, %v1787
    %v1792 = vadd.f32 %v1760, %v1788
    %v1793 = vadd.f32 %v1761, %v1789
    %vm1794 = vcmp.gt.f32.partialorder %v1786, 0.0
    %vm1795 = vcmp.gt.f32.partialorder %v1787, 0.0
    %vm1796 = vcmp.gt.f32.partialorder %v1788, 0.0
    %vm1797 = vcmp.gt.f32.partialorder %v1789, 0.0
    %v1798 = vmul.f32 %v1774, 0.2
    %v1799 = vmul.f32 %v1775, 0.2
    %v1800 = vmul.f32 %v1776, 0.2
    %v1801 = vmul.f32 %v1777, 0.2
    %v1802 = vadd.f32 %v1798, %v1307
    %v1803 = vadd.f32 %v1799, %v1309
    %v1804 = vadd.f32 %v1800, %v1733
    %v1805 = vadd.f32 %v1801, %v1735
    %v1806 = vsel %vm1794, %v1307, %v1802
    %v1807 = vsel %vm1795, %v1309, %v1803
    %v1808 = vsel %vm1796, %v1733, %v1804
    %v1809 = vsel %vm1797, %v1735, %v1805
    %vm1810 = vcmp.gt.f32.partialorder %v1806, 0.3
    %vm1811 = vcmp.gt.f32.partialorder %v1807, 0.3
    %vm1812 = vcmp.gt.f32.partialorder %v1808, 0.3
    %vm1813 = vcmp.gt.f32.partialorder %v1809, 0.3
    %v1814 = vsel %vm1810, 1, 0
    %v1815 = vsel %vm1811, 1, 0
    %v1816 = vsel %vm1812, 1, 0
    %v1817 = vsel %vm1813, 1, 0
    %v1818 = vcvt.s32.f32 %v1814
    %v1819 = vcvt.s32.f32 %v1815
    %v1820 = vcvt.s32.f32 %v1816
    %v1821 = vcvt.s32.f32 %v1817
    %v1822 = vadd.f32 %v1790, %v1818
    %v1823 = vadd.f32 %v1791, %v1819
    %v1824 = vadd.f32 %v1792, %v1820
    %v1825 = vadd.f32 %v1793, %v1821
    %vm1826 = vcmp.gt.f32.partialorder %v1818, 0.0
    %vm1827 = vcmp.gt.f32.partialorder %v1819, 0.0
    %vm1828 = vcmp.gt.f32.partialorder %v1820, 0.0
    %vm1829 = vcmp.gt.f32.partialorder %v1821, 0.0
    %v1830 = vmul.f32 %v1806, 0.2
    %v1831 = vmul.f32 %v1807, 0.2
    %v1832 = vmul.f32 %v1808, 0.2
    %v1833 = vmul.f32 %v1809, 0.2
    %v1834 = vadd.f32 %v1830, %v1307
    %v1835 = vadd.f32 %v1831, %v1309
    %v1836 = vadd.f32 %v1832, %v1733
    %v1837 = vadd.f32 %v1833, %v1735
    %v1838 = vsel %vm1826, %v1307, %v1834
    %v1839 = vsel %vm1827, %v1309, %v1835
    %v1840 = vsel %vm1828, %v1733, %v1836
    %v1841 = vsel %vm1829, %v1735, %v1837
    %vm1842 = vcmp.gt.f32.partialorder %v1838, 0.3
    %vm1843 = vcmp.gt.f32.partialorder %v1839, 0.3
    %vm1844 = vcmp.gt.f32.partialorder %v1840, 0.3
    %vm1845 = vcmp.gt.f32.partialorder %v1841, 0.3
    %v1846 = vsel %vm1842, 1, 0
    %v1847 = vsel %vm1843, 1, 0
    %v1848 = vsel %vm1844, 1, 0
    %v1849 = vsel %vm1845, 1, 0
    %v1850 = vcvt.s32.f32 %v1846
    %v1851 = vcvt.s32.f32 %v1847
    %v1852 = vcvt.s32.f32 %v1848
    %v1853 = vcvt.s32.f32 %v1849
    %v1854 = vadd.f32 %v1822, %v1850
    %v1855 = vadd.f32 %v1823, %v1851
    %v1856 = vadd.f32 %v1824, %v1852
    %v1857 = vadd.f32 %v1825, %v1853
    %v1858 = vmul.f32 %v1854, 0.25
    %v1859 = vmul.f32 %v1855, 0.25
    %v1860 = vmul.f32 %v1856, 0.25
    %v1861 = vmul.f32 %v1857, 0.25
    %v1862 = vld [vmem:[#allocation8] sm:$0xff]
    %v1863 = vld [vmem:[#allocation8 + $0x8] sm:$0xff]
    %v1864 = vld [vmem:[#allocation8 + $0x10] sm:$0xff]
    %v1865 = vld [vmem:[#allocation8 + $0x18] sm:$0xff]
    %v1866 = vld [vmem:[#allocation8 + $0x20] sm:$0xff]
    %v1867 = vld [vmem:[#allocation8 + $0x28] sm:$0xff]
    %v1868 = vld [vmem:[#allocation8 + $0x30] sm:$0xff]
    %v1869 = vld [vmem:[#allocation8 + $0x38] sm:$0xff]
    %v1870 = vld [vmem:[#allocation8 + $0x40] sm:$0xff]
    %v1871 = vld [vmem:[#allocation8 + $0x48] sm:$0xff]
    %v1872 = vld [vmem:[#allocation8 + $0x50] sm:$0xff]
    %v1873 = vld [vmem:[#allocation8 + $0x58] sm:$0xff]
    %v1874 = vld [vmem:[#allocation8 + $0x60] sm:$0xff]
    %v1875 = vld [vmem:[#allocation8 + $0x68] sm:$0xff]
    %v1876 = vld [vmem:[#allocation8 + $0x70] sm:$0xff]
    %v1877 = vld [vmem:[#allocation8 + $0x78] sm:$0xff]
    %v1878 = vld [vmem:[#allocation8 + $0x80] sm:$0xff]
    %v1879 = vld [vmem:[#allocation8 + $0x88] sm:$0xff]
    %v1880 = vld [vmem:[#allocation8 + $0x90] sm:$0xff]
    %v1881 = vld [vmem:[#allocation8 + $0x98] sm:$0xff]
    %v1882 = vld [vmem:[#allocation8 + $0xa0] sm:$0xff]
    %v1883 = vld [vmem:[#allocation8 + $0xa8] sm:$0xff]
    %v1884 = vld [vmem:[#allocation8 + $0xb0] sm:$0xff]
    %v1885 = vld [vmem:[#allocation8 + $0xb8] sm:$0xff]
    %v1886 = vld [vmem:[#allocation8 + $0xc0] sm:$0xff]
    %v1887 = vld [vmem:[#allocation8 + $0xc8] sm:$0xff]
    %v1888 = vld [vmem:[#allocation8 + $0xd0] sm:$0xff]
    %v1889 = vld [vmem:[#allocation8 + $0xd8] sm:$0xff]
    %v1890 = vld [vmem:[#allocation8 + $0xe0] sm:$0xff]
    %v1891 = vld [vmem:[#allocation8 + $0xe8] sm:$0xff]
    %v1892 = vld [vmem:[#allocation8 + $0xf0] sm:$0xff]
    %v1893 = vld [vmem:[#allocation8 + $0xf8] sm:$0xff]
    %v1894 = vld [vmem:[#allocation8 + $0x100] sm:$0xff]
    %v1895 = vld [vmem:[#allocation8 + $0x108] sm:$0xff]
    %v1896 = vld [vmem:[#allocation8 + $0x110] sm:$0xff]
    %v1897 = vld [vmem:[#allocation8 + $0x118] sm:$0xff]
    %v1898 = vld [vmem:[#allocation8 + $0x120] sm:$0xff]
    %v1899 = vld [vmem:[#allocation8 + $0x128] sm:$0xff]
    %v1900 = vld [vmem:[#allocation8 + $0x130] sm:$0xff]
    %v1901 = vld [vmem:[#allocation8 + $0x138] sm:$0xff]
    %v1902 = vld [vmem:[#allocation8 + $0x140] sm:$0xff]
    %v1903 = vld [vmem:[#allocation8 + $0x148] sm:$0xff]
    %v1904 = vld [vmem:[#allocation8 + $0x150] sm:$0xff]
    %v1905 = vld [vmem:[#allocation8 + $0x158] sm:$0xff]
    %v1906 = vld [vmem:[#allocation8 + $0x160] sm:$0xff]
    %v1907 = vld [vmem:[#allocation8 + $0x168] sm:$0xff]
    %v1908 = vld [vmem:[#allocation8 + $0x170] sm:$0xff]
    %v1909 = vld [vmem:[#allocation8 + $0x178] sm:$0xff]
    %v1910 = vld [vmem:[#allocation8 + $0x180] sm:$0xff]
    %v1911 = vld [vmem:[#allocation8 + $0x188] sm:$0xff]
    %v1912 = vld [vmem:[#allocation8 + $0x190] sm:$0xff]
    %v1913 = vld [vmem:[#allocation8 + $0x198] sm:$0xff]
    %v1914 = vld [vmem:[#allocation8 + $0x1a0] sm:$0xff]
    %v1915 = vld [vmem:[#allocation8 + $0x1a8] sm:$0xff]
    %v1916 = vld [vmem:[#allocation8 + $0x1b0] sm:$0xff]
    %v1917 = vld [vmem:[#allocation8 + $0x1b8] sm:$0xff]
    %v1918 = vld [vmem:[#allocation8 + $0x1c0] sm:$0xff]
    %v1919 = vld [vmem:[#allocation8 + $0x1c8] sm:$0xff]
    %v1920 = vld [vmem:[#allocation8 + $0x1d0] sm:$0xff]
    %v1921 = vld [vmem:[#allocation8 + $0x1d8] sm:$0xff]
    %v1922 = vld [vmem:[#allocation8 + $0x1e0] sm:$0xff]
    %v1923 = vld [vmem:[#allocation8 + $0x1e8] sm:$0xff]
    %v1924 = vld [vmem:[#allocation8 + $0x1f0] sm:$0xff]
    %v1925 = vld [vmem:[#allocation8 + $0x1f8] sm:$0xff]
    %v1926 = vld [vmem:[#allocation10] sm:$0x1]
    %v1928 = vlaneseq
    %v1929 = vshrl.u32 %v1928, 7
    %v1930 = vsub.s32 0, %v1929
    %v1931 = vrot.slane %v1926, %v1930
    %1933 = vmatprep.subr.mxu0 0.0
    %1934 = vmatpush1.msra.mxu0 %v1862
    %1935 = vmatprep.subr.mxu0 0.0
    %1936 = vmatpush1.msra.mxu0 %v1863
    %1937 = vmatprep.subr.mxu0 0.0
    %1938 = vmatpush1.msra.mxu0 %v1864
    %1939 = vmatprep.subr.mxu0 0.0
    %1940 = vmatpush1.msra.mxu0 %v1865
    %1941 = vmatprep.subr.mxu0 0.0
    %1942 = vmatpush1.msra.mxu0 %v1866
    %1943 = vmatprep.subr.mxu0 0.0
    %1944 = vmatpush1.msra.mxu0 %v1867
    %1945 = vmatprep.subr.mxu0 0.0
    %1946 = vmatpush1.msra.mxu0 %v1868
    %1947 = vmatprep.subr.mxu0 0.0
    %1948 = vmatpush1.msra.mxu0 %v1869
    %1949 = vmatprep.subr.mxu0 0.0
    %1950 = vmatpush1.msra.mxu0 %v1870
    %1951 = vmatprep.subr.mxu0 0.0
    %1952 = vmatpush1.msra.mxu0 %v1871
    %1953 = vmatprep.subr.mxu0 0.0
    %1954 = vmatpush1.msra.mxu0 %v1872
    %1955 = vmatprep.subr.mxu0 0.0
    %1956 = vmatpush1.msra.mxu0 %v1873
    %1957 = vmatprep.subr.mxu0 0.0
    %1958 = vmatpush1.msra.mxu0 %v1874
    %1959 = vmatprep.subr.mxu0 0.0
    %1960 = vmatpush1.msra.mxu0 %v1875
    %1961 = vmatprep.subr.mxu0 0.0
    %1962 = vmatpush1.msra.mxu0 %v1876
    %1963 = vmatprep.subr.mxu0 0.0
    %1964 = vmatpush1.msra.mxu0 %v1877
    %1965 = vmatprep.subr.mxu0 0.0
    %1966 = vmatpush1.msra.mxu0 %v1878
    %1967 = vmatprep.subr.mxu0 0.0
    %1968 = vmatpush1.msra.mxu0 %v1879
    %1969 = vmatprep.subr.mxu0 0.0
    %1970 = vmatpush1.msra.mxu0 %v1880
    %1971 = vmatprep.subr.mxu0 0.0
    %1972 = vmatpush1.msra.mxu0 %v1881
    %1973 = vmatprep.subr.mxu0 0.0
    %1974 = vmatpush1.msra.mxu0 %v1882
    %1975 = vmatprep.subr.mxu0 0.0
    %1976 = vmatpush1.msra.mxu0 %v1883
    %1977 = vmatprep.subr.mxu0 0.0
    %1978 = vmatpush1.msra.mxu0 %v1884
    %1979 = vmatprep.subr.mxu0 0.0
    %1980 = vmatpush1.msra.mxu0 %v1885
    %1981 = vmatprep.subr.mxu0 0.0
    %1982 = vmatpush1.msra.mxu0 %v1886
    %1983 = vmatprep.subr.mxu0 0.0
    %1984 = vmatpush1.msra.mxu0 %v1887
    %1985 = vmatprep.subr.mxu0 0.0
    %1986 = vmatpush1.msra.mxu0 %v1888
    %1987 = vmatprep.subr.mxu0 0.0
    %1988 = vmatpush1.msra.mxu0 %v1889
    %1989 = vmatprep.subr.mxu0 0.0
    %1990 = vmatpush1.msra.mxu0 %v1890
    %1991 = vmatprep.subr.mxu0 0.0
    %1992 = vmatpush1.msra.mxu0 %v1891
    %1993 = vmatprep.subr.mxu0 0.0
    %1994 = vmatpush1.msra.mxu0 %v1892
    %1995 = vmatprep.subr.mxu0 0.0
    %1996 = vmatpush1.msra.mxu0 %v1893
    %1997 = vmatprep.mubr.f32.mxu0 %v1859
    %1998 = vmatmul.mubr.f32.gmra.mrb[0].mxu0 %v1858
    %v1999 = vpop.f32.mrb[0].mxu0
    %v2000 = vadd.f32 %v1931, %v1999
    %v2001 = vpop.f32.mrb[0].mxu0
    %2002 = vdwg.mxu0
    %2003 = vmatprep.subr.mxu0 0.0
    %2004 = vmatpush1.msra.mxu0 %v1894
    %2005 = vmatprep.subr.mxu0 0.0
    %2006 = vmatpush1.msra.mxu0 %v1895
    %2007 = vmatprep.subr.mxu0 0.0
    %2008 = vmatpush1.msra.mxu0 %v1896
    %2009 = vmatprep.subr.mxu0 0.0
    %2010 = vmatpush1.msra.mxu0 %v1897
    %2011 = vmatprep.subr.mxu0 0.0
    %2012 = vmatpush1.msra.mxu0 %v1898
    %2013 = vmatprep.subr.mxu0 0.0
    %2014 = vmatpush1.msra.mxu0 %v1899
    %2015 = vmatprep.subr.mxu0 0.0
    %2016 = vmatpush1.msra.mxu0 %v1900
    %2017 = vmatprep.subr.mxu0 0.0
    %2018 = vmatpush1.msra.mxu0 %v1901
    %2019 = vmatprep.subr.mxu0 0.0
    %2020 = vmatpush1.msra.mxu0 %v1902
    %2021 = vmatprep.subr.mxu0 0.0
    %2022 = vmatpush1.msra.mxu0 %v1903
    %2023 = vmatprep.subr.mxu0 0.0
    %2024 = vmatpush1.msra.mxu0 %v1904
    %2025 = vmatprep.subr.mxu0 0.0
    %2026 = vmatpush1.msra.mxu0 %v1905
    %2027 = vmatprep.subr.mxu0 0.0
    %2028 = vmatpush1.msra.mxu0 %v1906
    %2029 = vmatprep.subr.mxu0 0.0
    %2030 = vmatpush1.msra.mxu0 %v1907
    %2031 = vmatprep.subr.mxu0 0.0
    %2032 = vmatpush1.msra.mxu0 %v1908
    %2033 = vmatprep.subr.mxu0 0.0
    %2034 = vmatpush1.msra.mxu0 %v1909
    %2035 = vmatprep.subr.mxu0 0.0
    %2036 = vmatpush1.msra.mxu0 %v1910
    %2037 = vmatprep.subr.mxu0 0.0
    %2038 = vmatpush1.msra.mxu0 %v1911
    %2039 = vmatprep.subr.mxu0 0.0
    %2040 = vmatpush1.msra.mxu0 %v1912
    %2041 = vmatprep.subr.mxu0 0.0
    %2042 = vmatpush1.msra.mxu0 %v1913
    %2043 = vmatprep.subr.mxu0 0.0
    %2044 = vmatpush1.msra.mxu0 %v1914
    %2045 = vmatprep.subr.mxu0 0.0
    %2046 = vmatpush1.msra.mxu0 %v1915
    %2047 = vmatprep.subr.mxu0 0.0
    %2048 = vmatpush1.msra.mxu0 %v1916
    %2049 = vmatprep.subr.mxu0 0.0
    %2050 = vmatpush1.msra.mxu0 %v1917
    %2051 = vmatprep.subr.mxu0 0.0
    %2052 = vmatpush1.msra.mxu0 %v1918
    %2053 = vmatprep.subr.mxu0 0.0
    %2054 = vmatpush1.msra.mxu0 %v1919
    %2055 = vmatprep.subr.mxu0 0.0
    %2056 = vmatpush1.msra.mxu0 %v1920
    %2057 = vmatprep.subr.mxu0 0.0
    %2058 = vmatpush1.msra.mxu0 %v1921
    %2059 = vmatprep.subr.mxu0 0.0
    %2060 = vmatpush1.msra.mxu0 %v1922
    %2061 = vmatprep.subr.mxu0 0.0
    %2062 = vmatpush1.msra.mxu0 %v1923
    %2063 = vmatprep.subr.mxu0 0.0
    %2064 = vmatpush1.msra.mxu0 %v1924
    %2065 = vmatprep.subr.mxu0 0.0
    %2066 = vmatpush1.msra.mxu0 %v1925
    %2067 = vmatprep.mubr.f32.mxu0 %v1861
    %2068 = vmatmul.mubr.f32.gmra.mrb[0].mxu0 %v1860
    %v2069 = vpop.f32.mrb[0].mxu0
    %v2070 = vadd.f32 %v2000, %v2069
    %v2071 = vpop.f32.mrb[0].mxu0
    %2072 = vdwg.mxu0
    %2073 = vst [vmem:[#allocation11] sm:$0xff] %v2070
    // Predicated region
    $region42: #{tpu_custom_call.1} parent=1 // pred_check
      _
    $region43: #{tpu_custom_call.1} parent=1 // pred_check_branch
      %2075 = sbr.rel (0) target = $region45
    $region44: #{tpu_custom_call.1} parent=1 // pred_region
      %s2077 = ssub.s32 128, 128
      %2078 = vsyncadd [#allocation4], %s2077
      %s2080 = sshll.u32 [#allocation11], 4
      %s2081 = int_to_ptr.vmem [resolvable:$true] %s2080
      %2083 = dma.vmem_to_hbm [thread:$0]  %s2081, 128, %s5, [#allocation4]
    $region45: #{tpu_custom_call.1} parent=1 // pred_fallthru
      _
    // Predicated region
    $region46: #{tpu_custom_call.1} parent=1 // pred_check
      _
    $region47: #{tpu_custom_call.1} parent=1 // pred_check_branch
      %2085 = sbr.rel (0) target = $region49
    $region48: #{tpu_custom_call.1} parent=1 // pred_region
      %2086 = dma.done [#allocation4], 128
    $region49: #{tpu_custom_call.1} parent=1 // pred_fallthru
      _
    %2087 = vsyncpa [#allocation3], 1
    %2088 = vsyncpa [#allocation6], 1
    %2089 = vsyncpa [#allocation9], 1
    %2090 = vsyncpa [#allocation4], 1

</llo_original>
